<compile_context>
chip_gen: v6e
topology: v6e:2x2x1
jax: 0.10.0
libtpu: 0.0.40
codegen_flags: <defaults>
</compile_context>

<pallas_src>
import functools

import jax
import jax.numpy as jnp
from jax import lax
from jax.experimental import pallas as pl
from jax.experimental.pallas import tpu as pltpu

D_MODEL = 32
NUM_HEADS = 4
D_K = D_MODEL // NUM_HEADS
D_MLP = 64
NUM_LAYERS = 2
LN_EPS = 1e-5


def _layer_norm(x, gamma, beta):
    mean = jnp.mean(x, axis=-1, keepdims=True)
    cent = x - mean
    var = jnp.mean(cent * cent, axis=-1, keepdims=True)
    return cent * lax.rsqrt(var + LN_EPS) * gamma + beta


def encoder_kernel(x_ref,
                   wq_ref, bq_ref, wk_ref, bk_ref, wv_ref, bv_ref, wo_ref, bo_ref,
                   w1_ref, b1_ref, w2_ref, b2_ref,
                   g1_ref, be1_ref, g2_ref, be2_ref,
                   out_ref, xc_ref, *, seq_len, num_heads):
    """One grid step = one batch block x one encoder layer.

    Grid axes: (batch_block [parallel], layer [arbitrary]).  The running
    activation for this batch block lives in the VMEM scratch `xc_ref` and is
    carried across the layer axis; the HBM output is written once, on the
    last layer.
    """
    layer = pl.program_id(1)

    @pl.when(layer == 0)
    def _():
        xc_ref[...] = x_ref[...].astype(jnp.float32)

    x = xc_ref[...]                                # (rows, d_model), f32
    rows, d_model = x.shape
    d_k = d_model // num_heads
    n_seq = rows // seq_len                        # sequences in this batch block (static)
    scale = 1.0 / (d_k ** 0.5)

    wq = wq_ref[0]; wk = wk_ref[0]; wv = wv_ref[0]; wo = wo_ref[0]
    bq = bq_ref[0]; bk = bk_ref[0]; bv = bv_ref[0]; bo = bo_ref[0]

    # Q / K / V projections on the whole flattened slab (one MXU matmul each).
    qp = jnp.dot(x, wq, preferred_element_type=jnp.float32) + bq
    kp = jnp.dot(x, wk, preferred_element_type=jnp.float32) + bk
    vp = jnp.dot(x, wv, preferred_element_type=jnp.float32) + bv

    # --- Multi-head attention ---------------------------------------------
    seq_outs = []
    for b in range(n_seq):                         # static loop over sequences in block
        r0 = b * seq_len
        acc = jnp.zeros((seq_len, d_model), jnp.float32)
        for h in range(num_heads):                 # static loop over heads
            c0 = h * d_k
            qh = qp[r0:r0 + seq_len, c0:c0 + d_k]
            kh = kp[r0:r0 + seq_len, c0:c0 + d_k]
            vh = vp[r0:r0 + seq_len, c0:c0 + d_k]

            # scores = qh @ kh^T, expressed as dot_general (no explicit transpose).
            scores = lax.dot_general(
                qh, kh, (((1,), (1,)), ((), ())),
                preferred_element_type=jnp.float32) * scale
            # TODO(synk): optional attention mask (masked_fill -inf) not implemented;
            # TransformerEncoder.forward always calls MHA with mask=None.

            m = jnp.max(scores, axis=-1, keepdims=True)
            p = jnp.exp(scores - m)
            attn = p * pl.reciprocal(jnp.sum(p, axis=-1, keepdims=True), approx=True)

            ctx = jnp.dot(attn, vh, preferred_element_type=jnp.float32)   # (S, d_k)
            # Accumulate straight into the output projection: no head concat.
            acc = acc + jnp.dot(ctx, wo[c0:c0 + d_k, :],
                                preferred_element_type=jnp.float32)
        seq_outs.append(acc)
    attn_out = seq_outs[0] if n_seq == 1 else jnp.concatenate(seq_outs, axis=0)
    attn_out = attn_out + bo

    # Residual + LayerNorm1 (dropout == identity in eval/inference mode).
    x1 = _layer_norm(x + attn_out, g1_ref[0], be1_ref[0])

    # --- FeedForward: relu(x @ W1 + b1) @ W2 + b2 ---------------------------
    hdn = jnp.maximum(
        jnp.dot(x1, w1_ref[0], preferred_element_type=jnp.float32) + b1_ref[0], 0.0)
    ff = jnp.dot(hdn, w2_ref[0], preferred_element_type=jnp.float32) + b2_ref[0]

    # Residual + LayerNorm2.
    x2 = _layer_norm(x1 + ff, g2_ref[0], be2_ref[0])

    xc_ref[...] = x2                               # carry to next layer

    @pl.when(layer == pl.num_programs(1) - 1)
    def _():
        out_ref[...] = x2.astype(out_ref.dtype)    # single dense slab store


def prepare_params(layer_params):
    """One-time weight preprocessing, hoisted out of the forward call:
    transpose nn.Linear weights (out,in) -> (in,out), reshape vectors to (1,dim)
    rows, and stack every parameter along a leading layer axis so one
    pallas_call can iterate layers on its grid."""
    def stack(name, fn):
        return jnp.stack([fn(p[name]) for p in layer_params])
    mat = lambda w: w.T
    row = lambda v: v.reshape(1, -1)
    packed = {}
    for name in ("wq", "wk", "wv", "wo", "w1", "w2"):
        packed[name] = stack(name, mat)
    for name in ("bq", "bk", "bv", "bo", "b1", "b2",
                 "ln1_g", "ln1_b", "ln2_g", "ln2_b"):
        packed[name] = stack(name, row)
    return packed


def transformer_encoder(x, packed):
    """x: (B, S, D) float32.  packed: output of prepare_params (stacked per-layer)."""
    B, S, D = x.shape
    L = packed["wq"].shape[0]

    # One sequence per batch-parallel grid step -> >= 2 parallel steps for the
    # dual-TensorCore case while each step still runs a full fused encoder layer
    # on a lane/sublane-dense (S, D) slab.  (For larger B, raise seq_per_step.)
    seq_per_step = 1
    n_steps = B // seq_per_step
    rows = seq_per_step * S

    x_flat = x.reshape(B * S, D)

    act_spec = pl.BlockSpec((rows, D), lambda b, l: (b, 0))

    def p_spec(a):
        _, r, c = a.shape
        return pl.BlockSpec((1, r, c), lambda b, l: (l, 0, 0))

    param_names = ("wq", "bq", "wk", "bk", "wv", "bv", "wo", "bo",
                   "w1", "b1", "w2", "b2",
                   "ln1_g", "ln1_b", "ln2_g", "ln2_b")
    params = [packed[n] for n in param_names]

    kernel = functools.partial(encoder_kernel, seq_len=S, num_heads=NUM_HEADS)

    out_flat = pl.pallas_call(
        kernel,
        out_shape=jax.ShapeDtypeStruct((B * S, D), x.dtype),
        grid_spec=pltpu.PrefetchScalarGridSpec(
            num_scalar_prefetch=0,
            grid=(n_steps, L),
            in_specs=[act_spec] + [p_spec(a) for a in params],
            out_specs=act_spec,
            scratch_shapes=[pltpu.VMEM((rows, D), jnp.float32)],
        ),
        compiler_params=pltpu.CompilerParams(
            dimension_semantics=("parallel", "arbitrary")),
    )(x_flat, *params)

    return out_flat.reshape(B, S, D)


# ----------------------------- pure-JAX reference -----------------------------
def ref_encoder(x, layer_params):
    def lin(t, w, b):                      # PyTorch nn.Linear: x @ W^T + b
        return t @ w.T + b

    def ln(t, g, bta):
        mu = t.mean(-1, keepdims=True)
        var = ((t - mu) ** 2).mean(-1, keepdims=True)
        return (t - mu) / jnp.sqrt(var + LN_EPS) * g + bta

    B, S, D = x.shape
    H, dk = NUM_HEADS, D_K
    for p in layer_params:
        q = lin(x, p["wq"], p["bq"]).reshape(B, S, H, dk).transpose(0, 2, 1, 3)
        k = lin(x, p["wk"], p["bk"]).reshape(B, S, H, dk).transpose(0, 2, 1, 3)
        v = lin(x, p["wv"], p["bv"]).reshape(B, S, H, dk).transpose(0, 2, 1, 3)
        scores = jnp.einsum("bhqd,bhkd->bhqk", q, k) / (dk ** 0.5)
        attn = jax.nn.softmax(scores, axis=-1)
        ctx = jnp.einsum("bhqk,bhkd->bhqd", attn, v)
        ctx = ctx.transpose(0, 2, 1, 3).reshape(B, S, D)
        attn_out = lin(ctx, p["wo"], p["bo"])
        x = ln(x + attn_out, p["ln1_g"], p["ln1_b"])
        ff = lin(jax.nn.relu(lin(x, p["w1"], p["b1"])), p["w2"], p["b2"])
        x = ln(x + ff, p["ln2_g"], p["ln2_b"])
    return x


def init_layer_params(key, d_model, d_mlp):
    ks = jax.random.split(key, 16)
    s = 0.1
    n = lambda k, shp: s * jax.random.normal(k, shp, jnp.float32)
    return {
        "wq": n(ks[0], (d_model, d_model)), "bq": n(ks[1], (d_model,)),
        "wk": n(ks[2], (d_model, d_model)), "bk": n(ks[3], (d_model,)),
        "wv": n(ks[4], (d_model, d_model)), "bv": n(ks[5], (d_model,)),
        "wo": n(ks[6], (d_model, d_model)), "bo": n(ks[7], (d_model,)),
        "w1": n(ks[8], (d_mlp, d_model)), "b1": n(ks[9], (d_mlp,)),
        "w2": n(ks[10], (d_model, d_mlp)), "b2": n(ks[11], (d_model,)),
        "ln1_g": 1.0 + n(ks[12], (d_model,)), "ln1_b": n(ks[13], (d_model,)),
        "ln2_g": 1.0 + n(ks[14], (d_model,)), "ln2_b": n(ks[15], (d_model,)),
    }


if __name__ == "__main__":
    B, S = 2, 8
    key = jax.random.PRNGKey(0)
    kx, kp = jax.random.split(key)
    x = jax.random.normal(kx, (B, S, D_MODEL), jnp.float32)
    layer_params = [init_layer_params(k, D_MODEL, D_MLP)
                    for k in jax.random.split(kp, NUM_LAYERS)]

    packed = prepare_params(layer_params)   # hoisted, one-time weight prep

    out = transformer_encoder(x, packed)
    out = jax.block_until_ready(out)

    ref = ref_encoder(x, layer_params)
    assert out.shape == (B, S, D_MODEL)
    max_err = float(jnp.max(jnp.abs(out - ref)))
    # Tolerance accounts for the approx-reciprocal softmax normalization.
    assert jnp.allclose(out, ref, atol=2e-2, rtol=2e-2), f"mismatch vs ref (max err {max_err})"

    print("KERNEL_OK")
</pallas_src>

<mosaic_0001>
module attributes {stable_mosaic.version = 11 : i64} {
  func.func @encoder_kernel(%arg0: i32, %arg1: i32, %arg2: memref<8x32xf32, #tpu.memory_space<vmem>>, %arg3: memref<1x32x32xf32, #tpu.memory_space<vmem>>, %arg4: memref<1x1x32xf32, #tpu.memory_space<vmem>>, %arg5: memref<1x32x32xf32, #tpu.memory_space<vmem>>, %arg6: memref<1x1x32xf32, #tpu.memory_space<vmem>>, %arg7: memref<1x32x32xf32, #tpu.memory_space<vmem>>, %arg8: memref<1x1x32xf32, #tpu.memory_space<vmem>>, %arg9: memref<1x32x32xf32, #tpu.memory_space<vmem>>, %arg10: memref<1x1x32xf32, #tpu.memory_space<vmem>>, %arg11: memref<1x32x64xf32, #tpu.memory_space<vmem>>, %arg12: memref<1x1x64xf32, #tpu.memory_space<vmem>>, %arg13: memref<1x64x32xf32, #tpu.memory_space<vmem>>, %arg14: memref<1x1x32xf32, #tpu.memory_space<vmem>>, %arg15: memref<1x1x32xf32, #tpu.memory_space<vmem>>, %arg16: memref<1x1x32xf32, #tpu.memory_space<vmem>>, %arg17: memref<1x1x32xf32, #tpu.memory_space<vmem>>, %arg18: memref<1x1x32xf32, #tpu.memory_space<vmem>>, %arg19: memref<8x32xf32, #tpu.memory_space<vmem>>, %arg20: memref<8x32xf32, #tpu.memory_space<vmem>>) attributes {dimension_semantics = [#tpu.dimension_semantics<parallel>, #tpu.dimension_semantics<arbitrary>], iteration_bounds = array<i64: 2, 2>, scalar_prefetch = 0 : i64, scratch_operands = 1 : i64, tpu.core_type = #tpu.core_type<tc>, window_params = [{transform_indices = @transform_0, window_bounds = array<i64: 8, 32>}, {transform_indices = @transform_1, window_bounds = array<i64: 1, 32, 32>}, {transform_indices = @transform_2, window_bounds = array<i64: 1, 1, 32>}, {transform_indices = @transform_3, window_bounds = array<i64: 1, 32, 32>}, {transform_indices = @transform_4, window_bounds = array<i64: 1, 1, 32>}, {transform_indices = @transform_5, window_bounds = array<i64: 1, 32, 32>}, {transform_indices = @transform_6, window_bounds = array<i64: 1, 1, 32>}, {transform_indices = @transform_7, window_bounds = array<i64: 1, 32, 32>}, {transform_indices = @transform_8, window_bounds = array<i64: 1, 1, 32>}, {transform_indices = @transform_9, window_bounds = array<i64: 1, 32, 64>}, {transform_indices = @transform_10, window_bounds = array<i64: 1, 1, 64>}, {transform_indices = @transform_11, window_bounds = array<i64: 1, 64, 32>}, {transform_indices = @transform_12, window_bounds = array<i64: 1, 1, 32>}, {transform_indices = @transform_13, window_bounds = array<i64: 1, 1, 32>}, {transform_indices = @transform_14, window_bounds = array<i64: 1, 1, 32>}, {transform_indices = @transform_15, window_bounds = array<i64: 1, 1, 32>}, {transform_indices = @transform_16, window_bounds = array<i64: 1, 1, 32>}, {transform_indices = @transform_17, window_bounds = array<i64: 8, 32>}]} {
    %c0_i32 = arith.constant 0 : i32
    %0 = arith.cmpi eq, %arg1, %c0_i32 : i32
    %1 = arith.extui %0 : i1 to i32
    %c0_i32_0 = arith.constant 0 : i32
    %2 = arith.cmpi ne, %1, %c0_i32_0 : i32
    scf.if %2 {
      %c0_93 = arith.constant 0 : index
      %c0_94 = arith.constant 0 : index
      %182 = vector.load %arg2[%c0_93, %c0_94] : memref<8x32xf32, #tpu.memory_space<vmem>>, vector<8x32xf32>
      %c0_95 = arith.constant 0 : index
      %c0_96 = arith.constant 0 : index
      %183 = vector.load %arg20[%c0_95, %c0_96] : memref<8x32xf32, #tpu.memory_space<vmem>>, vector<8x32xf32>
      tpu.vector_store %arg20[%c0_95, %c0_96], %182 {strides = array<i32>} : memref<8x32xf32, #tpu.memory_space<vmem>>, vector<8x32xf32>,
    } else {
    }
    %c0 = arith.constant 0 : index
    %c0_1 = arith.constant 0 : index
    %3 = vector.load %arg20[%c0, %c0_1] : memref<8x32xf32, #tpu.memory_space<vmem>>, vector<8x32xf32>
    %c0_2 = arith.constant 0 : index
    %c0_3 = arith.constant 0 : index
    %c0_4 = arith.constant 0 : index
    %4 = vector.load %arg3[%c0_2, %c0_3, %c0_4] : memref<1x32x32xf32, #tpu.memory_space<vmem>>, vector<1x32x32xf32>
    %5 = vector.shape_cast %4 : vector<1x32x32xf32> to vector<32x32xf32>
    %c0_5 = arith.constant 0 : index
    %c0_6 = arith.constant 0 : index
    %c0_7 = arith.constant 0 : index
    %6 = vector.load %arg5[%c0_5, %c0_6, %c0_7] : memref<1x32x32xf32, #tpu.memory_space<vmem>>, vector<1x32x32xf32>
    %7 = vector.shape_cast %6 : vector<1x32x32xf32> to vector<32x32xf32>
    %c0_8 = arith.constant 0 : index
    %c0_9 = arith.constant 0 : index
    %c0_10 = arith.constant 0 : index
    %8 = vector.load %arg7[%c0_8, %c0_9, %c0_10] : memref<1x32x32xf32, #tpu.memory_space<vmem>>, vector<1x32x32xf32>
    %9 = vector.shape_cast %8 : vector<1x32x32xf32> to vector<32x32xf32>
    %c0_11 = arith.constant 0 : index
    %c0_12 = arith.constant 0 : index
    %c0_13 = arith.constant 0 : index
    %10 = vector.load %arg9[%c0_11, %c0_12, %c0_13] : memref<1x32x32xf32, #tpu.memory_space<vmem>>, vector<1x32x32xf32>
    %11 = vector.shape_cast %10 : vector<1x32x32xf32> to vector<32x32xf32>
    %c0_14 = arith.constant 0 : index
    %c0_15 = arith.constant 0 : index
    %c0_16 = arith.constant 0 : index
    %12 = vector.load %arg4[%c0_14, %c0_15, %c0_16] : memref<1x1x32xf32, #tpu.memory_space<vmem>>, vector<1x1x32xf32>
    %13 = vector.shape_cast %12 : vector<1x1x32xf32> to vector<1x32xf32>
    %c0_17 = arith.constant 0 : index
    %c0_18 = arith.constant 0 : index
    %c0_19 = arith.constant 0 : index
    %14 = vector.load %arg6[%c0_17, %c0_18, %c0_19] : memref<1x1x32xf32, #tpu.memory_space<vmem>>, vector<1x1x32xf32>
    %15 = vector.shape_cast %14 : vector<1x1x32xf32> to vector<1x32xf32>
    %c0_20 = arith.constant 0 : index
    %c0_21 = arith.constant 0 : index
    %c0_22 = arith.constant 0 : index
    %16 = vector.load %arg8[%c0_20, %c0_21, %c0_22] : memref<1x1x32xf32, #tpu.memory_space<vmem>>, vector<1x1x32xf32>
    %17 = vector.shape_cast %16 : vector<1x1x32xf32> to vector<1x32xf32>
    %c0_23 = arith.constant 0 : index
    %c0_24 = arith.constant 0 : index
    %c0_25 = arith.constant 0 : index
    %18 = vector.load %arg10[%c0_23, %c0_24, %c0_25] : memref<1x1x32xf32, #tpu.memory_space<vmem>>, vector<1x1x32xf32>
    %19 = vector.shape_cast %18 : vector<1x1x32xf32> to vector<1x32xf32>
    %cst = arith.constant dense<0.000000e+00> : vector<8x32xf32>
    %20 = tpu.matmul %3, %5, %cst {dimension_numbers = #tpu.dot_dimension_numbers<[1], [0], [0], [1], [0, 0, 1, 1], [], []>} : vector<8x32xf32>, vector<32x32xf32>, vector<8x32xf32> -> vector<8x32xf32>
    %21 = vector.broadcast %13 : vector<1x32xf32> to vector<8x32xf32>
    %22 = arith.addf %20, %21 : vector<8x32xf32>
    %cst_26 = arith.constant dense<0.000000e+00> : vector<8x32xf32>
    %23 = tpu.matmul %3, %7, %cst_26 {dimension_numbers = #tpu.dot_dimension_numbers<[1], [0], [0], [1], [0, 0, 1, 1], [], []>} : vector<8x32xf32>, vector<32x32xf32>, vector<8x32xf32> -> vector<8x32xf32>
    %24 = vector.broadcast %15 : vector<1x32xf32> to vector<8x32xf32>
    %25 = arith.addf %23, %24 : vector<8x32xf32>
    %cst_27 = arith.constant dense<0.000000e+00> : vector<8x32xf32>
    %26 = tpu.matmul %3, %9, %cst_27 {dimension_numbers = #tpu.dot_dimension_numbers<[1], [0], [0], [1], [0, 0, 1, 1], [], []>} : vector<8x32xf32>, vector<32x32xf32>, vector<8x32xf32> -> vector<8x32xf32>
    %27 = vector.broadcast %17 : vector<1x32xf32> to vector<8x32xf32>
    %28 = arith.addf %26, %27 : vector<8x32xf32>
    %cst_28 = arith.constant 0.000000e+00 : f32
    %29 = vector.broadcast %cst_28 : f32 to vector<8x32xf32>
    %30 = vector.extract_strided_slice %22 {offsets = [0, 0], sizes = [8, 8], strides = [1, 1]} : vector<8x32xf32> to vector<8x8xf32>
    %31 = vector.extract_strided_slice %25 {offsets = [0, 0], sizes = [8, 8], strides = [1, 1]} : vector<8x32xf32> to vector<8x8xf32>
    %32 = vector.extract_strided_slice %28 {offsets = [0, 0], sizes = [8, 8], strides = [1, 1]} : vector<8x32xf32> to vector<8x8xf32>
    %cst_29 = arith.constant dense<0.000000e+00> : vector<8x8xf32>
    %33 = tpu.matmul %30, %31, %cst_29 {dimension_numbers = #tpu.dot_dimension_numbers<[1], [1], [0], [0], [0, 0, 1, 0], [], []>} : vector<8x8xf32>, vector<8x8xf32>, vector<8x8xf32> -> vector<8x8xf32>
    %cst_30 = arith.constant 0.353553385 : f32
    %34 = vector.broadcast %cst_30 : f32 to vector<8x8xf32>
    %35 = arith.mulf %33, %34 : vector<8x8xf32>
    %cst_31 = arith.constant dense<0xFF800000> : vector<8xf32>
    %36 = vector.multi_reduction <maximumf>, %35, %cst_31 [1] : vector<8x8xf32> to vector<8xf32>
    %37 = vector.shape_cast %36 : vector<8xf32> to vector<8x1xf32>
    %38 = vector.broadcast %37 : vector<8x1xf32> to vector<8x8xf32>
    %39 = arith.subf %35, %38 : vector<8x8xf32>
    %40 = math.exp %39 : vector<8x8xf32>
    %cst_32 = arith.constant dense<0.000000e+00> : vector<8xf32>
    %41 = vector.multi_reduction <add>, %40, %cst_32 [1] : vector<8x8xf32> to vector<8xf32>
    %42 = vector.shape_cast %41 : vector<8xf32> to vector<8x1xf32>
    %43 = tpu.reciprocal %42 {approx = true} : vector<8x1xf32> -> vector<8x1xf32>
    %44 = vector.broadcast %43 : vector<8x1xf32> to vector<8x8xf32>
    %45 = arith.mulf %40, %44 : vector<8x8xf32>
    %cst_33 = arith.constant dense<0.000000e+00> : vector<8x8xf32>
    %46 = tpu.matmul %45, %32, %cst_33 {dimension_numbers = #tpu.dot_dimension_numbers<[1], [0], [0], [1], [0, 0, 1, 1], [], []>} : vector<8x8xf32>, vector<8x8xf32>, vector<8x8xf32> -> vector<8x8xf32>
    %47 = vector.extract_strided_slice %11 {offsets = [0, 0], sizes = [8, 32], strides = [1, 1]} : vector<32x32xf32> to vector<8x32xf32>
    %cst_34 = arith.constant dense<0.000000e+00> : vector<8x32xf32>
    %48 = tpu.matmul %46, %47, %cst_34 {dimension_numbers = #tpu.dot_dimension_numbers<[1], [0], [0], [1], [0, 0, 1, 1], [], []>} : vector<8x8xf32>, vector<8x32xf32>, vector<8x32xf32> -> vector<8x32xf32>
    %49 = arith.addf %29, %48 : vector<8x32xf32>
    %50 = vector.extract_strided_slice %22 {offsets = [0, 8], sizes = [8, 8], strides = [1, 1]} : vector<8x32xf32> to vector<8x8xf32>
    %51 = vector.extract_strided_slice %25 {offsets = [0, 8], sizes = [8, 8], strides = [1, 1]} : vector<8x32xf32> to vector<8x8xf32>
    %52 = vector.extract_strided_slice %28 {offsets = [0, 8], sizes = [8, 8], strides = [1, 1]} : vector<8x32xf32> to vector<8x8xf32>
    %cst_35 = arith.constant dense<0.000000e+00> : vector<8x8xf32>
    %53 = tpu.matmul %50, %51, %cst_35 {dimension_numbers = #tpu.dot_dimension_numbers<[1], [1], [0], [0], [0, 0, 1, 0], [], []>} : vector<8x8xf32>, vector<8x8xf32>, vector<8x8xf32> -> vector<8x8xf32>
    %cst_36 = arith.constant 0.353553385 : f32
    %54 = vector.broadcast %cst_36 : f32 to vector<8x8xf32>
    %55 = arith.mulf %53, %54 : vector<8x8xf32>
    %cst_37 = arith.constant dense<0xFF800000> : vector<8xf32>
    %56 = vector.multi_reduction <maximumf>, %55, %cst_37 [1] : vector<8x8xf32> to vector<8xf32>
    %57 = vector.shape_cast %56 : vector<8xf32> to vector<8x1xf32>
    %58 = vector.broadcast %57 : vector<8x1xf32> to vector<8x8xf32>
    %59 = arith.subf %55, %58 : vector<8x8xf32>
    %60 = math.exp %59 : vector<8x8xf32>
    %cst_38 = arith.constant dense<0.000000e+00> : vector<8xf32>
    %61 = vector.multi_reduction <add>, %60, %cst_38 [1] : vector<8x8xf32> to vector<8xf32>
    %62 = vector.shape_cast %61 : vector<8xf32> to vector<8x1xf32>
    %63 = tpu.reciprocal %62 {approx = true} : vector<8x1xf32> -> vector<8x1xf32>
    %64 = vector.broadcast %63 : vector<8x1xf32> to vector<8x8xf32>
    %65 = arith.mulf %60, %64 : vector<8x8xf32>
    %cst_39 = arith.constant dense<0.000000e+00> : vector<8x8xf32>
    %66 = tpu.matmul %65, %52, %cst_39 {dimension_numbers = #tpu.dot_dimension_numbers<[1], [0], [0], [1], [0, 0, 1, 1], [], []>} : vector<8x8xf32>, vector<8x8xf32>, vector<8x8xf32> -> vector<8x8xf32>
    %67 = vector.extract_strided_slice %11 {offsets = [8, 0], sizes = [8, 32], strides = [1, 1]} : vector<32x32xf32> to vector<8x32xf32>
    %cst_40 = arith.constant dense<0.000000e+00> : vector<8x32xf32>
    %68 = tpu.matmul %66, %67, %cst_40 {dimension_numbers = #tpu.dot_dimension_numbers<[1], [0], [0], [1], [0, 0, 1, 1], [], []>} : vector<8x8xf32>, vector<8x32xf32>, vector<8x32xf32> -> vector<8x32xf32>
    %69 = arith.addf %49, %68 : vector<8x32xf32>
    %70 = vector.extract_strided_slice %22 {offsets = [0, 16], sizes = [8, 8], strides = [1, 1]} : vector<8x32xf32> to vector<8x8xf32>
    %71 = vector.extract_strided_slice %25 {offsets = [0, 16], sizes = [8, 8], strides = [1, 1]} : vector<8x32xf32> to vector<8x8xf32>
    %72 = vector.extract_strided_slice %28 {offsets = [0, 16], sizes = [8, 8], strides = [1, 1]} : vector<8x32xf32> to vector<8x8xf32>
    %cst_41 = arith.constant dense<0.000000e+00> : vector<8x8xf32>
    %73 = tpu.matmul %70, %71, %cst_41 {dimension_numbers = #tpu.dot_dimension_numbers<[1], [1], [0], [0], [0, 0, 1, 0], [], []>} : vector<8x8xf32>, vector<8x8xf32>, vector<8x8xf32> -> vector<8x8xf32>
    %cst_42 = arith.constant 0.353553385 : f32
    %74 = vector.broadcast %cst_42 : f32 to vector<8x8xf32>
    %75 = arith.mulf %73, %74 : vector<8x8xf32>
    %cst_43 = arith.constant dense<0xFF800000> : vector<8xf32>
    %76 = vector.multi_reduction <maximumf>, %75, %cst_43 [1] : vector<8x8xf32> to vector<8xf32>
    %77 = vector.shape_cast %76 : vector<8xf32> to vector<8x1xf32>
    %78 = vector.broadcast %77 : vector<8x1xf32> to vector<8x8xf32>
    %79 = arith.subf %75, %78 : vector<8x8xf32>
    %80 = math.exp %79 : vector<8x8xf32>
    %cst_44 = arith.constant dense<0.000000e+00> : vector<8xf32>
    %81 = vector.multi_reduction <add>, %80, %cst_44 [1] : vector<8x8xf32> to vector<8xf32>
    %82 = vector.shape_cast %81 : vector<8xf32> to vector<8x1xf32>
    %83 = tpu.reciprocal %82 {approx = true} : vector<8x1xf32> -> vector<8x1xf32>
    %84 = vector.broadcast %83 : vector<8x1xf32> to vector<8x8xf32>
    %85 = arith.mulf %80, %84 : vector<8x8xf32>
    %cst_45 = arith.constant dense<0.000000e+00> : vector<8x8xf32>
    %86 = tpu.matmul %85, %72, %cst_45 {dimension_numbers = #tpu.dot_dimension_numbers<[1], [0], [0], [1], [0, 0, 1, 1], [], []>} : vector<8x8xf32>, vector<8x8xf32>, vector<8x8xf32> -> vector<8x8xf32>
    %87 = vector.extract_strided_slice %11 {offsets = [16, 0], sizes = [8, 32], strides = [1, 1]} : vector<32x32xf32> to vector<8x32xf32>
    %cst_46 = arith.constant dense<0.000000e+00> : vector<8x32xf32>
    %88 = tpu.matmul %86, %87, %cst_46 {dimension_numbers = #tpu.dot_dimension_numbers<[1], [0], [0], [1], [0, 0, 1, 1], [], []>} : vector<8x8xf32>, vector<8x32xf32>, vector<8x32xf32> -> vector<8x32xf32>
    %89 = arith.addf %69, %88 : vector<8x32xf32>
    %90 = vector.extract_strided_slice %22 {offsets = [0, 24], sizes = [8, 8], strides = [1, 1]} : vector<8x32xf32> to vector<8x8xf32>
    %91 = vector.extract_strided_slice %25 {offsets = [0, 24], sizes = [8, 8], strides = [1, 1]} : vector<8x32xf32> to vector<8x8xf32>
    %92 = vector.extract_strided_slice %28 {offsets = [0, 24], sizes = [8, 8], strides = [1, 1]} : vector<8x32xf32> to vector<8x8xf32>
    %cst_47 = arith.constant dense<0.000000e+00> : vector<8x8xf32>
    %93 = tpu.matmul %90, %91, %cst_47 {dimension_numbers = #tpu.dot_dimension_numbers<[1], [1], [0], [0], [0, 0, 1, 0], [], []>} : vector<8x8xf32>, vector<8x8xf32>, vector<8x8xf32> -> vector<8x8xf32>
    %cst_48 = arith.constant 0.353553385 : f32
    %94 = vector.broadcast %cst_48 : f32 to vector<8x8xf32>
    %95 = arith.mulf %93, %94 : vector<8x8xf32>
    %cst_49 = arith.constant dense<0xFF800000> : vector<8xf32>
    %96 = vector.multi_reduction <maximumf>, %95, %cst_49 [1] : vector<8x8xf32> to vector<8xf32>
    %97 = vector.shape_cast %96 : vector<8xf32> to vector<8x1xf32>
    %98 = vector.broadcast %97 : vector<8x1xf32> to vector<8x8xf32>
    %99 = arith.subf %95, %98 : vector<8x8xf32>
    %100 = math.exp %99 : vector<8x8xf32>
    %cst_50 = arith.constant dense<0.000000e+00> : vector<8xf32>
    %101 = vector.multi_reduction <add>, %100, %cst_50 [1] : vector<8x8xf32> to vector<8xf32>
    %102 = vector.shape_cast %101 : vector<8xf32> to vector<8x1xf32>
    %103 = tpu.reciprocal %102 {approx = true} : vector<8x1xf32> -> vector<8x1xf32>
    %104 = vector.broadcast %103 : vector<8x1xf32> to vector<8x8xf32>
    %105 = arith.mulf %100, %104 : vector<8x8xf32>
    %cst_51 = arith.constant dense<0.000000e+00> : vector<8x8xf32>
    %106 = tpu.matmul %105, %92, %cst_51 {dimension_numbers = #tpu.dot_dimension_numbers<[1], [0], [0], [1], [0, 0, 1, 1], [], []>} : vector<8x8xf32>, vector<8x8xf32>, vector<8x8xf32> -> vector<8x8xf32>
    %107 = vector.extract_strided_slice %11 {offsets = [24, 0], sizes = [8, 32], strides = [1, 1]} : vector<32x32xf32> to vector<8x32xf32>
    %cst_52 = arith.constant dense<0.000000e+00> : vector<8x32xf32>
    %108 = tpu.matmul %106, %107, %cst_52 {dimension_numbers = #tpu.dot_dimension_numbers<[1], [0], [0], [1], [0, 0, 1, 1], [], []>} : vector<8x8xf32>, vector<8x32xf32>, vector<8x32xf32> -> vector<8x32xf32>
    %109 = arith.addf %89, %108 : vector<8x32xf32>
    %110 = vector.broadcast %19 : vector<1x32xf32> to vector<8x32xf32>
    %111 = arith.addf %109, %110 : vector<8x32xf32>
    %112 = arith.addf %3, %111 : vector<8x32xf32>
    %c0_53 = arith.constant 0 : index
    %c0_54 = arith.constant 0 : index
    %c0_55 = arith.constant 0 : index
    %113 = vector.load %arg15[%c0_53, %c0_54, %c0_55] : memref<1x1x32xf32, #tpu.memory_space<vmem>>, vector<1x1x32xf32>
    %114 = vector.shape_cast %113 : vector<1x1x32xf32> to vector<1x32xf32>
    %c0_56 = arith.constant 0 : index
    %c0_57 = arith.constant 0 : index
    %c0_58 = arith.constant 0 : index
    %115 = vector.load %arg16[%c0_56, %c0_57, %c0_58] : memref<1x1x32xf32, #tpu.memory_space<vmem>>, vector<1x1x32xf32>
    %116 = vector.shape_cast %115 : vector<1x1x32xf32> to vector<1x32xf32>
    %cst_59 = arith.constant dense<0.000000e+00> : vector<8xf32>
    %117 = vector.multi_reduction <add>, %112, %cst_59 [1] : vector<8x32xf32> to vector<8xf32>
    %118 = vector.shape_cast %117 : vector<8xf32> to vector<8x1xf32>
    %cst_60 = arith.constant 3.200000e+01 : f32
    %119 = vector.broadcast %cst_60 : f32 to vector<8x1xf32>
    %120 = arith.divf %118, %119 : vector<8x1xf32>
    %121 = vector.broadcast %120 : vector<8x1xf32> to vector<8x32xf32>
    %122 = arith.subf %112, %121 : vector<8x32xf32>
    %123 = arith.mulf %122, %122 : vector<8x32xf32>
    %cst_61 = arith.constant dense<0.000000e+00> : vector<8xf32>
    %124 = vector.multi_reduction <add>, %123, %cst_61 [1] : vector<8x32xf32> to vector<8xf32>
    %125 = vector.shape_cast %124 : vector<8xf32> to vector<8x1xf32>
    %cst_62 = arith.constant 3.200000e+01 : f32
    %126 = vector.broadcast %cst_62 : f32 to vector<8x1xf32>
    %127 = arith.divf %125, %126 : vector<8x1xf32>
    %cst_63 = arith.constant 9.99999974E-6 : f32
    %128 = vector.broadcast %cst_63 : f32 to vector<8x1xf32>
    %129 = arith.addf %127, %128 : vector<8x1xf32>
    %130 = math.rsqrt %129 : vector<8x1xf32>
    %131 = vector.broadcast %130 : vector<8x1xf32> to vector<8x32xf32>
    %132 = arith.mulf %122, %131 : vector<8x32xf32>
    %133 = vector.broadcast %114 : vector<1x32xf32> to vector<8x32xf32>
    %134 = arith.mulf %132, %133 : vector<8x32xf32>
    %135 = vector.broadcast %116 : vector<1x32xf32> to vector<8x32xf32>
    %136 = arith.addf %134, %135 : vector<8x32xf32>
    %c0_64 = arith.constant 0 : index
    %c0_65 = arith.constant 0 : index
    %c0_66 = arith.constant 0 : index
    %137 = vector.load %arg11[%c0_64, %c0_65, %c0_66] : memref<1x32x64xf32, #tpu.memory_space<vmem>>, vector<1x32x64xf32>
    %138 = vector.shape_cast %137 : vector<1x32x64xf32> to vector<32x64xf32>
    %cst_67 = arith.constant dense<0.000000e+00> : vector<8x64xf32>
    %139 = tpu.matmul %136, %138, %cst_67 {dimension_numbers = #tpu.dot_dimension_numbers<[1], [0], [0], [1], [0, 0, 1, 1], [], []>} : vector<8x32xf32>, vector<32x64xf32>, vector<8x64xf32> -> vector<8x64xf32>
    %c0_68 = arith.constant 0 : index
    %c0_69 = arith.constant 0 : index
    %c0_70 = arith.constant 0 : index
    %140 = vector.load %arg12[%c0_68, %c0_69, %c0_70] : memref<1x1x64xf32, #tpu.memory_space<vmem>>, vector<1x1x64xf32>
    %141 = vector.shape_cast %140 : vector<1x1x64xf32> to vector<1x64xf32>
    %142 = vector.broadcast %141 : vector<1x64xf32> to vector<8x64xf32>
    %143 = arith.addf %139, %142 : vector<8x64xf32>
    %cst_71 = arith.constant 0.000000e+00 : f32
    %144 = vector.broadcast %cst_71 : f32 to vector<8x64xf32>
    %145 = arith.maximumf %143, %144 : vector<8x64xf32>
    %c0_72 = arith.constant 0 : index
    %c0_73 = arith.constant 0 : index
    %c0_74 = arith.constant 0 : index
    %146 = vector.load %arg13[%c0_72, %c0_73, %c0_74] : memref<1x64x32xf32, #tpu.memory_space<vmem>>, vector<1x64x32xf32>
    %147 = vector.shape_cast %146 : vector<1x64x32xf32> to vector<64x32xf32>
    %cst_75 = arith.constant dense<0.000000e+00> : vector<8x32xf32>
    %148 = tpu.matmul %145, %147, %cst_75 {dimension_numbers = #tpu.dot_dimension_numbers<[1], [0], [0], [1], [0, 0, 1, 1], [], []>} : vector<8x64xf32>, vector<64x32xf32>, vector<8x32xf32> -> vector<8x32xf32>
    %c0_76 = arith.constant 0 : index
    %c0_77 = arith.constant 0 : index
    %c0_78 = arith.constant 0 : index
    %149 = vector.load %arg14[%c0_76, %c0_77, %c0_78] : memref<1x1x32xf32, #tpu.memory_space<vmem>>, vector<1x1x32xf32>
    %150 = vector.shape_cast %149 : vector<1x1x32xf32> to vector<1x32xf32>
    %151 = vector.broadcast %150 : vector<1x32xf32> to vector<8x32xf32>
    %152 = arith.addf %148, %151 : vector<8x32xf32>
    %153 = arith.addf %136, %152 : vector<8x32xf32>
    %c0_79 = arith.constant 0 : index
    %c0_80 = arith.constant 0 : index
    %c0_81 = arith.constant 0 : index
    %154 = vector.load %arg17[%c0_79, %c0_80, %c0_81] : memref<1x1x32xf32, #tpu.memory_space<vmem>>, vector<1x1x32xf32>
    %155 = vector.shape_cast %154 : vector<1x1x32xf32> to vector<1x32xf32>
    %c0_82 = arith.constant 0 : index
    %c0_83 = arith.constant 0 : index
    %c0_84 = arith.constant 0 : index
    %156 = vector.load %arg18[%c0_82, %c0_83, %c0_84] : memref<1x1x32xf32, #tpu.memory_space<vmem>>, vector<1x1x32xf32>
    %157 = vector.shape_cast %156 : vector<1x1x32xf32> to vector<1x32xf32>
    %cst_85 = arith.constant dense<0.000000e+00> : vector<8xf32>
    %158 = vector.multi_reduction <add>, %153, %cst_85 [1] : vector<8x32xf32> to vector<8xf32>
    %159 = vector.shape_cast %158 : vector<8xf32> to vector<8x1xf32>
    %cst_86 = arith.constant 3.200000e+01 : f32
    %160 = vector.broadcast %cst_86 : f32 to vector<8x1xf32>
    %161 = arith.divf %159, %160 : vector<8x1xf32>
    %162 = vector.broadcast %161 : vector<8x1xf32> to vector<8x32xf32>
    %163 = arith.subf %153, %162 : vector<8x32xf32>
    %164 = arith.mulf %163, %163 : vector<8x32xf32>
    %cst_87 = arith.constant dense<0.000000e+00> : vector<8xf32>
    %165 = vector.multi_reduction <add>, %164, %cst_87 [1] : vector<8x32xf32> to vector<8xf32>
    %166 = vector.shape_cast %165 : vector<8xf32> to vector<8x1xf32>
    %cst_88 = arith.constant 3.200000e+01 : f32
    %167 = vector.broadcast %cst_88 : f32 to vector<8x1xf32>
    %168 = arith.divf %166, %167 : vector<8x1xf32>
    %cst_89 = arith.constant 9.99999974E-6 : f32
    %169 = vector.broadcast %cst_89 : f32 to vector<8x1xf32>
    %170 = arith.addf %168, %169 : vector<8x1xf32>
    %171 = math.rsqrt %170 : vector<8x1xf32>
    %172 = vector.broadcast %171 : vector<8x1xf32> to vector<8x32xf32>
    %173 = arith.mulf %163, %172 : vector<8x32xf32>
    %174 = vector.broadcast %155 : vector<1x32xf32> to vector<8x32xf32>
    %175 = arith.mulf %173, %174 : vector<8x32xf32>
    %176 = vector.broadcast %157 : vector<1x32xf32> to vector<8x32xf32>
    %177 = arith.addf %175, %176 : vector<8x32xf32>
    %c0_90 = arith.constant 0 : index
    %c0_91 = arith.constant 0 : index
    %178 = vector.load %arg20[%c0_90, %c0_91] : memref<8x32xf32, #tpu.memory_space<vmem>>, vector<8x32xf32>
    tpu.vector_store %arg20[%c0_90, %c0_91], %177 {strides = array<i32>} : memref<8x32xf32, #tpu.memory_space<vmem>>, vector<8x32xf32>,
    %c1_i32 = arith.constant 1 : i32
    %179 = arith.cmpi eq, %arg1, %c1_i32 : i32
    %180 = arith.extui %179 : i1 to i32
    %c0_i32_92 = arith.constant 0 : i32
    %181 = arith.cmpi ne, %180, %c0_i32_92 : i32
    scf.if %181 {
      %c0_93 = arith.constant 0 : index
      %c0_94 = arith.constant 0 : index
      %182 = vector.load %arg19[%c0_93, %c0_94] : memref<8x32xf32, #tpu.memory_space<vmem>>, vector<8x32xf32>
      tpu.vector_store %arg19[%c0_93, %c0_94], %177 {strides = array<i32>} : memref<8x32xf32, #tpu.memory_space<vmem>>, vector<8x32xf32>,
    } else {
    }
    return
  }
  func.func @transform_0(%arg0: i32, %arg1: i32) -> (i32, i32) {
    %c0_i32 = arith.constant 0 : i32
    %c0_i32_0 = arith.constant 0 : i32
    return %arg0, %c0_i32 : i32, i32
  }
  func.func @transform_1(%arg0: i32, %arg1: i32) -> (i32, i32, i32) {
    %c0_i32 = arith.constant 0 : i32
    %c0_i32_0 = arith.constant 0 : i32
    %c0_i32_1 = arith.constant 0 : i32
    return %arg1, %c0_i32, %c0_i32_0 : i32, i32, i32
  }
  func.func @transform_2(%arg0: i32, %arg1: i32) -> (i32, i32, i32) {
    %c0_i32 = arith.constant 0 : i32
    %c0_i32_0 = arith.constant 0 : i32
    %c0_i32_1 = arith.constant 0 : i32
    return %arg1, %c0_i32, %c0_i32_0 : i32, i32, i32
  }
  func.func @transform_3(%arg0: i32, %arg1: i32) -> (i32, i32, i32) {
    %c0_i32 = arith.constant 0 : i32
    %c0_i32_0 = arith.constant 0 : i32
    %c0_i32_1 = arith.constant 0 : i32
    return %arg1, %c0_i32, %c0_i32_0 : i32, i32, i32
  }
  func.func @transform_4(%arg0: i32, %arg1: i32) -> (i32, i32, i32) {
    %c0_i32 = arith.constant 0 : i32
    %c0_i32_0 = arith.constant 0 : i32
    %c0_i32_1 = arith.constant 0 : i32
    return %arg1, %c0_i32, %c0_i32_0 : i32, i32, i32
  }
  func.func @transform_5(%arg0: i32, %arg1: i32) -> (i32, i32, i32) {
    %c0_i32 = arith.constant 0 : i32
    %c0_i32_0 = arith.constant 0 : i32
    %c0_i32_1 = arith.constant 0 : i32
    return %arg1, %c0_i32, %c0_i32_0 : i32, i32, i32
  }
  func.func @transform_6(%arg0: i32, %arg1: i32) -> (i32, i32, i32) {
    %c0_i32 = arith.constant 0 : i32
    %c0_i32_0 = arith.constant 0 : i32
    %c0_i32_1 = arith.constant 0 : i32
    return %arg1, %c0_i32, %c0_i32_0 : i32, i32, i32
  }
  func.func @transform_7(%arg0: i32, %arg1: i32) -> (i32, i32, i32) {
    %c0_i32 = arith.constant 0 : i32
    %c0_i32_0 = arith.constant 0 : i32
    %c0_i32_1 = arith.constant 0 : i32
    return %arg1, %c0_i32, %c0_i32_0 : i32, i32, i32
  }
  func.func @transform_8(%arg0: i32, %arg1: i32) -> (i32, i32, i32) {
    %c0_i32 = arith.constant 0 : i32
    %c0_i32_0 = arith.constant 0 : i32
    %c0_i32_1 = arith.constant 0 : i32
    return %arg1, %c0_i32, %c0_i32_0 : i32, i32, i32
  }
  func.func @transform_9(%arg0: i32, %arg1: i32) -> (i32, i32, i32) {
    %c0_i32 = arith.constant 0 : i32
    %c0_i32_0 = arith.constant 0 : i32
    %c0_i32_1 = arith.constant 0 : i32
    return %arg1, %c0_i32, %c0_i32_0 : i32, i32, i32
  }
  func.func @transform_10(%arg0: i32, %arg1: i32) -> (i32, i32, i32) {
    %c0_i32 = arith.constant 0 : i32
    %c0_i32_0 = arith.constant 0 : i32
    %c0_i32_1 = arith.constant 0 : i32
    return %arg1, %c0_i32, %c0_i32_0 : i32, i32, i32
  }
  func.func @transform_11(%arg0: i32, %arg1: i32) -> (i32, i32, i32) {
    %c0_i32 = arith.constant 0 : i32
    %c0_i32_0 = arith.constant 0 : i32
    %c0_i32_1 = arith.constant 0 : i32
    return %arg1, %c0_i32, %c0_i32_0 : i32, i32, i32
  }
  func.func @transform_12(%arg0: i32, %arg1: i32) -> (i32, i32, i32) {
    %c0_i32 = arith.constant 0 : i32
    %c0_i32_0 = arith.constant 0 : i32
    %c0_i32_1 = arith.constant 0 : i32
    return %arg1, %c0_i32, %c0_i32_0 : i32, i32, i32
  }
  func.func @transform_13(%arg0: i32, %arg1: i32) -> (i32, i32, i32) {
    %c0_i32 = arith.constant 0 : i32
    %c0_i32_0 = arith.constant 0 : i32
    %c0_i32_1 = arith.constant 0 : i32
    return %arg1, %c0_i32, %c0_i32_0 : i32, i32, i32
  }
  func.func @transform_14(%arg0: i32, %arg1: i32) -> (i32, i32, i32) {
    %c0_i32 = arith.constant 0 : i32
    %c0_i32_0 = arith.constant 0 : i32
    %c0_i32_1 = arith.constant 0 : i32
    return %arg1, %c0_i32, %c0_i32_0 : i32, i32, i32
  }
  func.func @transform_15(%arg0: i32, %arg1: i32) -> (i32, i32, i32) {
    %c0_i32 = arith.constant 0 : i32
    %c0_i32_0 = arith.constant 0 : i32
    %c0_i32_1 = arith.constant 0 : i32
    return %arg1, %c0_i32, %c0_i32_0 : i32, i32, i32
  }
  func.func @transform_16(%arg0: i32, %arg1: i32) -> (i32, i32, i32) {
    %c0_i32 = arith.constant 0 : i32
    %c0_i32_0 = arith.constant 0 : i32
    %c0_i32_1 = arith.constant 0 : i32
    return %arg1, %c0_i32, %c0_i32_0 : i32, i32, i32
  }
  func.func @transform_17(%arg0: i32, %arg1: i32) -> (i32, i32) {
    %c0_i32 = arith.constant 0 : i32
    %c0_i32_0 = arith.constant 0 : i32
    return %arg0, %c0_i32 : i32, i32
  }
}

</mosaic_0001>

<llo_original>
// kernel: tpu_custom_call.1
$region0: #{tpu_custom_call.1}
  #allocation0 [shape = 'u32[]', space=smem, size = 0x4, offset = 0x4, fixed_abs, tag = 'smem constant byte address 0x4 - core index']
  #allocation1 [shape = 'u32[144,128]{1,0:T(1,128)}', space=vmem, size = 0x12000, scoped, tag = 'internal scratch']
  #allocation2 [shape = 'f32[8,32]{1,0:T(8,128)}', space=vmem, size = 0x1000, scoped, tag = 'scratch operand']
  %s0 = inlined_call_operand.hbm [shape: f32[16,32], index: 0, kind: input, shape index: {}]
  %s1 = inlined_call_operand.vmem [shape: f32[2,32,32], index: 1, kind: input, shape index: {}]
  %s2 = inlined_call_operand.vmem [shape: f32[2,1,32], index: 2, kind: input, shape index: {}]
  %s3 = inlined_call_operand.vmem [shape: f32[2,32,32], index: 3, kind: input, shape index: {}]
  %s4 = inlined_call_operand.vmem [shape: f32[2,1,32], index: 4, kind: input, shape index: {}]
  %s5 = inlined_call_operand.vmem [shape: f32[2,32,32], index: 5, kind: input, shape index: {}]
  %s6 = inlined_call_operand.vmem [shape: f32[2,1,32], index: 6, kind: input, shape index: {}]
  %s7 = inlined_call_operand.hbm [shape: f32[2,32,32], index: 7, kind: input, shape index: {}]
  %s8 = inlined_call_operand.vmem [shape: f32[2,1,32], index: 8, kind: input, shape index: {}]
  %s9 = inlined_call_operand.hbm [shape: f32[2,32,64], index: 9, kind: input, shape index: {}]
  %s10 = inlined_call_operand.vmem [shape: f32[2,1,64], index: 10, kind: input, shape index: {}]
  %s11 = inlined_call_operand.vmem [shape: f32[2,64,32], index: 11, kind: input, shape index: {}]
  %s12 = inlined_call_operand.vmem [shape: f32[2,1,32], index: 12, kind: input, shape index: {}]
  %s13 = inlined_call_operand.vmem [shape: f32[2,1,32], index: 13, kind: input, shape index: {}]
  %s14 = inlined_call_operand.vmem [shape: f32[2,1,32], index: 14, kind: input, shape index: {}]
  %s15 = inlined_call_operand.vmem [shape: f32[2,1,32], index: 15, kind: input, shape index: {}]
  %s16 = inlined_call_operand.vmem [shape: f32[2,1,32], index: 16, kind: input, shape index: {}]
  %s17 = inlined_call_operand.hbm [shape: f32[16,32], index: 17, kind: output, shape index: {}]
  %s18 = sld [smem:[#allocation0]]
  $region121: #{tpu_custom_call.1} parent=0
    _
  %s20 = ssub.s32 1, %s18
  %s21 = scalar_select 0, %s20, %s18
  $region1: #{tpu_custom_call.1} parent=0
    #allocation3 [shape = 'u8[8192]{0}', space=vmem, size = 0x2000, scoped, tag = 'input window, operand 0']
    #allocation4 [shape = 's32[2]{0}', space=sflag, size = 0x8, scoped, tag = 'scoped memory for tpu_custom_call.1']
    #allocation5 [shape = 's32[2]{0}', space=sflag, size = 0x8, scoped, tag = 'scoped memory for tpu_custom_call.1']
    #allocation6 [shape = 'u8[32768]{0}', space=vmem, size = 0x8000, scoped, tag = 'input window, operand 7']
    #allocation7 [shape = 's32[2]{0}', space=sflag, size = 0x8, scoped, tag = 'scoped memory for tpu_custom_call.1']
    #allocation8 [shape = 'u8[32768]{0}', space=vmem, size = 0x8000, scoped, tag = 'input window, operand 9']
    #allocation9 [shape = 'u8[8192]{0}', space=vmem, size = 0x2000, scoped, tag = 'output window, operand 0']
    %22 = vsyncpa [#allocation4], 0
    %s23 = scalar_lea.sflag [#allocation4], 1
    %24 = vsyncpa %s23, 0
    %25 = vsyncpa [#allocation7], 0
    %s26 = scalar_lea.sflag [#allocation7], 1
    %27 = vsyncpa %s26, 0
    %28 = vsyncpa [#allocation5], 0
    %s29 = scalar_lea.sflag [#allocation5], 1
    %30 = vsyncpa %s29, 0
    loop: start=0, step=1, limit=6
    $region2: #{tpu_custom_call.1} parent=1 // loop_pre_header
      _
    $region3: #{tpu_custom_call.1} parent=1 // loop_header
      %s32 = sphi 0, %s36
      %p33 = scmp.ge.s32.totalorder %s32, 6
      %s39 = sphi 0, %s51
      %s40 = sphi 0, %s47
      %s41 = sphi 0, %s39
      %s42 = sphi 0, %s40
      %s43 = sphi 0, %s41
      %s44 = sphi 0, %s42
      %s54 = sphi 0, %s56
      %s57 = sphi 0, %s54
      %s58 = sphi 0, %s57
      %s74 = sphi 0, %s58
      %s80 = sphi 0, %s82
      %s83 = sphi 0, %s80
      %s84 = sphi 0, %s83
      %s100 = sphi 0, %s84
      %s106 = sphi 0, %s108
      %s109 = sphi 0, %s106
      %s110 = sphi 0, %s109
      %s126 = sphi 0, %s110
      %s132 = sphi 0, %s134
      %s135 = sphi 0, %s132
      %s136 = sphi 0, %s135
      %s152 = sphi 0, %s136
      %s158 = sphi 0, %s160
      %s161 = sphi 0, %s158
      %s162 = sphi 0, %s161
      %s178 = sphi 0, %s162
      %s184 = sphi 0, %s186
      %s187 = sphi 0, %s184
      %s188 = sphi 0, %s187
      %s204 = sphi 0, %s188
      %s210 = sphi 0, %s212
      %s213 = sphi 0, %s210
      %s214 = sphi 0, %s213
      %s230 = sphi 0, %s214
      %s236 = sphi 0, %s238
      %s239 = sphi 0, %s236
      %s240 = sphi 0, %s239
      %s256 = sphi 0, %s240
      %s262 = sphi 0, %s264
      %s265 = sphi 0, %s262
      %s266 = sphi 0, %s265
      %s282 = sphi 0, %s266
      %s288 = sphi 0, %s290
      %s291 = sphi 0, %s288
      %s292 = sphi 0, %s291
      %s308 = sphi 0, %s292
      %s314 = sphi 0, %s316
      %s317 = sphi 0, %s314
      %s318 = sphi 0, %s317
      %s334 = sphi 0, %s318
      %s340 = sphi 0, %s342
      %s343 = sphi 0, %s340
      %s344 = sphi 0, %s343
      %s360 = sphi 0, %s344
      %s366 = sphi 0, %s368
      %s369 = sphi 0, %s366
      %s370 = sphi 0, %s369
      %s386 = sphi 0, %s370
      %s392 = sphi 0, %s394
      %s395 = sphi 0, %s392
      %s396 = sphi 0, %s395
      %s412 = sphi 0, %s396
      %s418 = sphi 0, %s420
      %s421 = sphi 0, %s418
      %s422 = sphi 0, %s421
      %s438 = sphi 0, %s422
      %s444 = sphi 0, %s446
      %s447 = sphi 0, %s444
      %s448 = sphi 0, %s447
      %s464 = sphi 0, %s448
      %s470 = sphi 0, %s472
      %s473 = sphi 0, %s470
      %s474 = sphi 0, %s473
      %s490 = sphi 0, %s474
      %s496 = sphi 0, %s498
      %s499 = sphi 0, %s496
      %s500 = sphi 0, %s499
      %s516 = sphi 0, %s500
    $region4: #{tpu_custom_call.1} parent=1 // loop_header_branch
      %35 = sbr.rel (%p33) target = $region8
    $region5: #{tpu_custom_call.1} parent=1 // loop_body
      %s37 = ssub.s32 %s32, 1
      %s38 = ssub.s32 %s32, 2
      %s45 = sadd.s32 1, %s40
      %p46 = scmp.ge.s32.totalorder %s45, 2
      %s47 = scalar_select %p46, 0, %s45
      %s48 = sadd.s32 1, %s39
      %s49 = scalar_select %p46, %s48, %s39
      %p50 = scmp.ge.s32.totalorder %s49, 2
      %s51 = scalar_select %p50, 0, %s49
      %s52 = ssub.s32 %s39, %s51
      %p53 = scmp.eq.s32.totalorder %s52, 0
      %s55 = sadd.s32 %s54, 1
      %s56 = scalar_select %p53, %s54, %s55
      %p59 = pneg %p53
      %p60 = scmp.eq.s32.totalorder %s32, 3
      %p61 = por %p59, %p60
      %p62 = scmp.ne.s32.totalorder %s54, %s57
      %p63 = scmp.eq.s32.totalorder %s32, 0
      %p64 = por %p62, %p63
      %p65 = scmp.ne.s32.totalorder %s54, %s57
      %p66 = scmp.eq.s32.totalorder %s37, 3
      %p67 = por %p65, %p66
      %p68 = scmp.ne.s32.totalorder %s57, %s58
      %p69 = scmp.eq.s32.totalorder %s37, 0
      %p70 = por %p68, %p69
      %p71 = scmp.ne.s32.totalorder %s57, %s58
      %p72 = scmp.eq.s32.totalorder %s38, 3
      %p73 = por %p71, %p72
      %p75 = scmp.ne.s32.totalorder %s58, %s74
      %p76 = scmp.eq.s32.totalorder %s38, 0
      %p77 = por %p75, %p76
      %s78 = ssub.s32 %s40, %s47
      %p79 = scmp.eq.s32.totalorder %s78, 0
      %s81 = sadd.s32 %s80, 1
      %s82 = scalar_select %p79, %s80, %s81
      %p85 = pneg %p79
      %p86 = scmp.eq.s32.totalorder %s32, 3
      %p87 = por %p85, %p86
      %p88 = scmp.ne.s32.totalorder %s80, %s83
      %p89 = scmp.eq.s32.totalorder %s32, 0
      %p90 = por %p88, %p89
      %p91 = scmp.ne.s32.totalorder %s80, %s83
      %p92 = scmp.eq.s32.totalorder %s37, 3
      %p93 = por %p91, %p92
      %p94 = scmp.ne.s32.totalorder %s83, %s84
      %p95 = scmp.eq.s32.totalorder %s37, 0
      %p96 = por %p94, %p95
      %p97 = scmp.ne.s32.totalorder %s83, %s84
      %p98 = scmp.eq.s32.totalorder %s38, 3
      %p99 = por %p97, %p98
      %p101 = scmp.ne.s32.totalorder %s84, %s100
      %p102 = scmp.eq.s32.totalorder %s38, 0
      %p103 = por %p101, %p102
      %s104 = ssub.s32 %s40, %s47
      %p105 = scmp.eq.s32.totalorder %s104, 0
      %s107 = sadd.s32 %s106, 1
      %s108 = scalar_select %p105, %s106, %s107
      %p111 = pneg %p105
      %p112 = scmp.eq.s32.totalorder %s32, 3
      %p113 = por %p111, %p112
      %p114 = scmp.ne.s32.totalorder %s106, %s109
      %p115 = scmp.eq.s32.totalorder %s32, 0
      %p116 = por %p114, %p115
      %p117 = scmp.ne.s32.totalorder %s106, %s109
      %p118 = scmp.eq.s32.totalorder %s37, 3
      %p119 = por %p117, %p118
      %p120 = scmp.ne.s32.totalorder %s109, %s110
      %p121 = scmp.eq.s32.totalorder %s37, 0
      %p122 = por %p120, %p121
      %p123 = scmp.ne.s32.totalorder %s109, %s110
      %p124 = scmp.eq.s32.totalorder %s38, 3
      %p125 = por %p123, %p124
      %p127 = scmp.ne.s32.totalorder %s110, %s126
      %p128 = scmp.eq.s32.totalorder %s38, 0
      %p129 = por %p127, %p128
      %s130 = ssub.s32 %s40, %s47
      %p131 = scmp.eq.s32.totalorder %s130, 0
      %s133 = sadd.s32 %s132, 1
      %s134 = scalar_select %p131, %s132, %s133
      %p137 = pneg %p131
      %p138 = scmp.eq.s32.totalorder %s32, 3
      %p139 = por %p137, %p138
      %p140 = scmp.ne.s32.totalorder %s132, %s135
      %p141 = scmp.eq.s32.totalorder %s32, 0
      %p142 = por %p140, %p141
      %p143 = scmp.ne.s32.totalorder %s132, %s135
      %p144 = scmp.eq.s32.totalorder %s37, 3
      %p145 = por %p143, %p144
      %p146 = scmp.ne.s32.totalorder %s135, %s136
      %p147 = scmp.eq.s32.totalorder %s37, 0
      %p148 = por %p146, %p147
      %p149 = scmp.ne.s32.totalorder %s135, %s136
      %p150 = scmp.eq.s32.totalorder %s38, 3
      %p151 = por %p149, %p150
      %p153 = scmp.ne.s32.totalorder %s136, %s152
      %p154 = scmp.eq.s32.totalorder %s38, 0
      %p155 = por %p153, %p154
      %s156 = ssub.s32 %s40, %s47
      %p157 = scmp.eq.s32.totalorder %s156, 0
      %s159 = sadd.s32 %s158, 1
      %s160 = scalar_select %p157, %s158, %s159
      %p163 = pneg %p157
      %p164 = scmp.eq.s32.totalorder %s32, 3
      %p165 = por %p163, %p164
      %p166 = scmp.ne.s32.totalorder %s158, %s161
      %p167 = scmp.eq.s32.totalorder %s32, 0
      %p168 = por %p166, %p167
      %p169 = scmp.ne.s32.totalorder %s158, %s161
      %p170 = scmp.eq.s32.totalorder %s37, 3
      %p171 = por %p169, %p170
      %p172 = scmp.ne.s32.totalorder %s161, %s162
      %p173 = scmp.eq.s32.totalorder %s37, 0
      %p174 = por %p172, %p173
      %p175 = scmp.ne.s32.totalorder %s161, %s162
      %p176 = scmp.eq.s32.totalorder %s38, 3
      %p177 = por %p175, %p176
      %p179 = scmp.ne.s32.totalorder %s162, %s178
      %p180 = scmp.eq.s32.totalorder %s38, 0
      %p181 = por %p179, %p180
      %s182 = ssub.s32 %s40, %s47
      %p183 = scmp.eq.s32.totalorder %s182, 0
      %s185 = sadd.s32 %s184, 1
      %s186 = scalar_select %p183, %s184, %s185
      %p189 = pneg %p183
      %p190 = scmp.eq.s32.totalorder %s32, 3
      %p191 = por %p189, %p190
      %p192 = scmp.ne.s32.totalorder %s184, %s187
      %p193 = scmp.eq.s32.totalorder %s32, 0
      %p194 = por %p192, %p193
      %p195 = scmp.ne.s32.totalorder %s184, %s187
      %p196 = scmp.eq.s32.totalorder %s37, 3
      %p197 = por %p195, %p196
      %p198 = scmp.ne.s32.totalorder %s187, %s188
      %p199 = scmp.eq.s32.totalorder %s37, 0
      %p200 = por %p198, %p199
      %p201 = scmp.ne.s32.totalorder %s187, %s188
      %p202 = scmp.eq.s32.totalorder %s38, 3
      %p203 = por %p201, %p202
      %p205 = scmp.ne.s32.totalorder %s188, %s204
      %p206 = scmp.eq.s32.totalorder %s38, 0
      %p207 = por %p205, %p206
      %s208 = ssub.s32 %s40, %s47
      %p209 = scmp.eq.s32.totalorder %s208, 0
      %s211 = sadd.s32 %s210, 1
      %s212 = scalar_select %p209, %s210, %s211
      %p215 = pneg %p209
      %p216 = scmp.eq.s32.totalorder %s32, 3
      %p217 = por %p215, %p216
      %p218 = scmp.ne.s32.totalorder %s210, %s213
      %p219 = scmp.eq.s32.totalorder %s32, 0
      %p220 = por %p218, %p219
      %p221 = scmp.ne.s32.totalorder %s210, %s213
      %p222 = scmp.eq.s32.totalorder %s37, 3
      %p223 = por %p221, %p222
      %p224 = scmp.ne.s32.totalorder %s213, %s214
      %p225 = scmp.eq.s32.totalorder %s37, 0
      %p226 = por %p224, %p225
      %p227 = scmp.ne.s32.totalorder %s213, %s214
      %p228 = scmp.eq.s32.totalorder %s38, 3
      %p229 = por %p227, %p228
      %p231 = scmp.ne.s32.totalorder %s214, %s230
      %p232 = scmp.eq.s32.totalorder %s38, 0
      %p233 = por %p231, %p232
      %s234 = ssub.s32 %s40, %s47
      %p235 = scmp.eq.s32.totalorder %s234, 0
      %s237 = sadd.s32 %s236, 1
      %s238 = scalar_select %p235, %s236, %s237
      %p241 = pneg %p235
      %p242 = scmp.eq.s32.totalorder %s32, 3
      %p243 = por %p241, %p242
      %p244 = scmp.ne.s32.totalorder %s236, %s239
      %p245 = scmp.eq.s32.totalorder %s32, 0
      %p246 = por %p244, %p245
      %p247 = scmp.ne.s32.totalorder %s236, %s239
      %p248 = scmp.eq.s32.totalorder %s37, 3
      %p249 = por %p247, %p248
      %p250 = scmp.ne.s32.totalorder %s239, %s240
      %p251 = scmp.eq.s32.totalorder %s37, 0
      %p252 = por %p250, %p251
      %p253 = scmp.ne.s32.totalorder %s239, %s240
      %p254 = scmp.eq.s32.totalorder %s38, 3
      %p255 = por %p253, %p254
      %p257 = scmp.ne.s32.totalorder %s240, %s256
      %p258 = scmp.eq.s32.totalorder %s38, 0
      %p259 = por %p257, %p258
      %s260 = ssub.s32 %s40, %s47
      %p261 = scmp.eq.s32.totalorder %s260, 0
      %s263 = sadd.s32 %s262, 1
      %s264 = scalar_select %p261, %s262, %s263
      %p267 = pneg %p261
      %p268 = scmp.eq.s32.totalorder %s32, 3
      %p269 = por %p267, %p268
      %p270 = scmp.ne.s32.totalorder %s262, %s265
      %p271 = scmp.eq.s32.totalorder %s32, 0
      %p272 = por %p270, %p271
      %p273 = scmp.ne.s32.totalorder %s262, %s265
      %p274 = scmp.eq.s32.totalorder %s37, 3
      %p275 = por %p273, %p274
      %p276 = scmp.ne.s32.totalorder %s265, %s266
      %p277 = scmp.eq.s32.totalorder %s37, 0
      %p278 = por %p276, %p277
      %p279 = scmp.ne.s32.totalorder %s265, %s266
      %p280 = scmp.eq.s32.totalorder %s38, 3
      %p281 = por %p279, %p280
      %p283 = scmp.ne.s32.totalorder %s266, %s282
      %p284 = scmp.eq.s32.totalorder %s38, 0
      %p285 = por %p283, %p284
      %s286 = ssub.s32 %s40, %s47
      %p287 = scmp.eq.s32.totalorder %s286, 0
      %s289 = sadd.s32 %s288, 1
      %s290 = scalar_select %p287, %s288, %s289
      %p293 = pneg %p287
      %p294 = scmp.eq.s32.totalorder %s32, 3
      %p295 = por %p293, %p294
      %p296 = scmp.ne.s32.totalorder %s288, %s291
      %p297 = scmp.eq.s32.totalorder %s32, 0
      %p298 = por %p296, %p297
      %p299 = scmp.ne.s32.totalorder %s288, %s291
      %p300 = scmp.eq.s32.totalorder %s37, 3
      %p301 = por %p299, %p300
      %p302 = scmp.ne.s32.totalorder %s291, %s292
      %p303 = scmp.eq.s32.totalorder %s37, 0
      %p304 = por %p302, %p303
      %p305 = scmp.ne.s32.totalorder %s291, %s292
      %p306 = scmp.eq.s32.totalorder %s38, 3
      %p307 = por %p305, %p306
      %p309 = scmp.ne.s32.totalorder %s292, %s308
      %p310 = scmp.eq.s32.totalorder %s38, 0
      %p311 = por %p309, %p310
      %s312 = ssub.s32 %s40, %s47
      %p313 = scmp.eq.s32.totalorder %s312, 0
      %s315 = sadd.s32 %s314, 1
      %s316 = scalar_select %p313, %s314, %s315
      %p319 = pneg %p313
      %p320 = scmp.eq.s32.totalorder %s32, 3
      %p321 = por %p319, %p320
      %p322 = scmp.ne.s32.totalorder %s314, %s317
      %p323 = scmp.eq.s32.totalorder %s32, 0
      %p324 = por %p322, %p323
      %p325 = scmp.ne.s32.totalorder %s314, %s317
      %p326 = scmp.eq.s32.totalorder %s37, 3
      %p327 = por %p325, %p326
      %p328 = scmp.ne.s32.totalorder %s317, %s318
      %p329 = scmp.eq.s32.totalorder %s37, 0
      %p330 = por %p328, %p329
      %p331 = scmp.ne.s32.totalorder %s317, %s318
      %p332 = scmp.eq.s32.totalorder %s38, 3
      %p333 = por %p331, %p332
      %p335 = scmp.ne.s32.totalorder %s318, %s334
      %p336 = scmp.eq.s32.totalorder %s38, 0
      %p337 = por %p335, %p336
      %s338 = ssub.s32 %s40, %s47
      %p339 = scmp.eq.s32.totalorder %s338, 0
      %s341 = sadd.s32 %s340, 1
      %s342 = scalar_select %p339, %s340, %s341
      %p345 = pneg %p339
      %p346 = scmp.eq.s32.totalorder %s32, 3
      %p347 = por %p345, %p346
      %p348 = scmp.ne.s32.totalorder %s340, %s343
      %p349 = scmp.eq.s32.totalorder %s32, 0
      %p350 = por %p348, %p349
      %p351 = scmp.ne.s32.totalorder %s340, %s343
      %p352 = scmp.eq.s32.totalorder %s37, 3
      %p353 = por %p351, %p352
      %p354 = scmp.ne.s32.totalorder %s343, %s344
      %p355 = scmp.eq.s32.totalorder %s37, 0
      %p356 = por %p354, %p355
      %p357 = scmp.ne.s32.totalorder %s343, %s344
      %p358 = scmp.eq.s32.totalorder %s38, 3
      %p359 = por %p357, %p358
      %p361 = scmp.ne.s32.totalorder %s344, %s360
      %p362 = scmp.eq.s32.totalorder %s38, 0
      %p363 = por %p361, %p362
      %s364 = ssub.s32 %s40, %s47
      %p365 = scmp.eq.s32.totalorder %s364, 0
      %s367 = sadd.s32 %s366, 1
      %s368 = scalar_select %p365, %s366, %s367
      %p371 = pneg %p365
      %p372 = scmp.eq.s32.totalorder %s32, 3
      %p373 = por %p371, %p372
      %p374 = scmp.ne.s32.totalorder %s366, %s369
      %p375 = scmp.eq.s32.totalorder %s32, 0
      %p376 = por %p374, %p375
      %p377 = scmp.ne.s32.totalorder %s366, %s369
      %p378 = scmp.eq.s32.totalorder %s37, 3
      %p379 = por %p377, %p378
      %p380 = scmp.ne.s32.totalorder %s369, %s370
      %p381 = scmp.eq.s32.totalorder %s37, 0
      %p382 = por %p380, %p381
      %p383 = scmp.ne.s32.totalorder %s369, %s370
      %p384 = scmp.eq.s32.totalorder %s38, 3
      %p385 = por %p383, %p384
      %p387 = scmp.ne.s32.totalorder %s370, %s386
      %p388 = scmp.eq.s32.totalorder %s38, 0
      %p389 = por %p387, %p388
      %s390 = ssub.s32 %s40, %s47
      %p391 = scmp.eq.s32.totalorder %s390, 0
      %s393 = sadd.s32 %s392, 1
      %s394 = scalar_select %p391, %s392, %s393
      %p397 = pneg %p391
      %p398 = scmp.eq.s32.totalorder %s32, 3
      %p399 = por %p397, %p398
      %p400 = scmp.ne.s32.totalorder %s392, %s395
      %p401 = scmp.eq.s32.totalorder %s32, 0
      %p402 = por %p400, %p401
      %p403 = scmp.ne.s32.totalorder %s392, %s395
      %p404 = scmp.eq.s32.totalorder %s37, 3
      %p405 = por %p403, %p404
      %p406 = scmp.ne.s32.totalorder %s395, %s396
      %p407 = scmp.eq.s32.totalorder %s37, 0
      %p408 = por %p406, %p407
      %p409 = scmp.ne.s32.totalorder %s395, %s396
      %p410 = scmp.eq.s32.totalorder %s38, 3
      %p411 = por %p409, %p410
      %p413 = scmp.ne.s32.totalorder %s396, %s412
      %p414 = scmp.eq.s32.totalorder %s38, 0
      %p415 = por %p413, %p414
      %s416 = ssub.s32 %s40, %s47
      %p417 = scmp.eq.s32.totalorder %s416, 0
      %s419 = sadd.s32 %s418, 1
      %s420 = scalar_select %p417, %s418, %s419
      %p423 = pneg %p417
      %p424 = scmp.eq.s32.totalorder %s32, 3
      %p425 = por %p423, %p424
      %p426 = scmp.ne.s32.totalorder %s418, %s421
      %p427 = scmp.eq.s32.totalorder %s32, 0
      %p428 = por %p426, %p427
      %p429 = scmp.ne.s32.totalorder %s418, %s421
      %p430 = scmp.eq.s32.totalorder %s37, 3
      %p431 = por %p429, %p430
      %p432 = scmp.ne.s32.totalorder %s421, %s422
      %p433 = scmp.eq.s32.totalorder %s37, 0
      %p434 = por %p432, %p433
      %p435 = scmp.ne.s32.totalorder %s421, %s422
      %p436 = scmp.eq.s32.totalorder %s38, 3
      %p437 = por %p435, %p436
      %p439 = scmp.ne.s32.totalorder %s422, %s438
      %p440 = scmp.eq.s32.totalorder %s38, 0
      %p441 = por %p439, %p440
      %s442 = ssub.s32 %s40, %s47
      %p443 = scmp.eq.s32.totalorder %s442, 0
      %s445 = sadd.s32 %s444, 1
      %s446 = scalar_select %p443, %s444, %s445
      %p449 = pneg %p443
      %p450 = scmp.eq.s32.totalorder %s32, 3
      %p451 = por %p449, %p450
      %p452 = scmp.ne.s32.totalorder %s444, %s447
      %p453 = scmp.eq.s32.totalorder %s32, 0
      %p454 = por %p452, %p453
      %p455 = scmp.ne.s32.totalorder %s444, %s447
      %p456 = scmp.eq.s32.totalorder %s37, 3
      %p457 = por %p455, %p456
      %p458 = scmp.ne.s32.totalorder %s447, %s448
      %p459 = scmp.eq.s32.totalorder %s37, 0
      %p460 = por %p458, %p459
      %p461 = scmp.ne.s32.totalorder %s447, %s448
      %p462 = scmp.eq.s32.totalorder %s38, 3
      %p463 = por %p461, %p462
      %p465 = scmp.ne.s32.totalorder %s448, %s464
      %p466 = scmp.eq.s32.totalorder %s38, 0
      %p467 = por %p465, %p466
      %s468 = ssub.s32 %s40, %s47
      %p469 = scmp.eq.s32.totalorder %s468, 0
      %s471 = sadd.s32 %s470, 1
      %s472 = scalar_select %p469, %s470, %s471
      %p475 = pneg %p469
      %p476 = scmp.eq.s32.totalorder %s32, 3
      %p477 = por %p475, %p476
      %p478 = scmp.ne.s32.totalorder %s470, %s473
      %p479 = scmp.eq.s32.totalorder %s32, 0
      %p480 = por %p478, %p479
      %p481 = scmp.ne.s32.totalorder %s470, %s473
      %p482 = scmp.eq.s32.totalorder %s37, 3
      %p483 = por %p481, %p482
      %p484 = scmp.ne.s32.totalorder %s473, %s474
      %p485 = scmp.eq.s32.totalorder %s37, 0
      %p486 = por %p484, %p485
      %p487 = scmp.ne.s32.totalorder %s473, %s474
      %p488 = scmp.eq.s32.totalorder %s38, 3
      %p489 = por %p487, %p488
      %p491 = scmp.ne.s32.totalorder %s474, %s490
      %p492 = scmp.eq.s32.totalorder %s38, 0
      %p493 = por %p491, %p492
      %s494 = ssub.s32 %s39, %s51
      %p495 = scmp.eq.s32.totalorder %s494, 0
      %s497 = sadd.s32 %s496, 1
      %s498 = scalar_select %p495, %s496, %s497
      %p501 = pneg %p495
      %p502 = scmp.eq.s32.totalorder %s32, 3
      %p503 = por %p501, %p502
      %p504 = scmp.ne.s32.totalorder %s496, %s499
      %p505 = scmp.eq.s32.totalorder %s32, 0
      %p506 = por %p504, %p505
      %p507 = scmp.ne.s32.totalorder %s496, %s499
      %p508 = scmp.eq.s32.totalorder %s37, 3
      %p509 = por %p507, %p508
      %p510 = scmp.ne.s32.totalorder %s499, %s500
      %p511 = scmp.eq.s32.totalorder %s37, 0
      %p512 = por %p510, %p511
      %p513 = scmp.ne.s32.totalorder %s499, %s500
      %p514 = scmp.eq.s32.totalorder %s38, 3
      %p515 = por %p513, %p514
      %p517 = scmp.ne.s32.totalorder %s500, %s516
      %p518 = scmp.eq.s32.totalorder %s38, 0
      %p519 = por %p517, %p518
      %p520 = scmp.le.s32.totalorder 1, %s32
      %p521 = scmp.lt.s32.totalorder %s32, 5
      %p522 = pnand %p520, %p521
      %p523 = pneg %p522
      // Predicated region
      $region9: #{tpu_custom_call.1} parent=5 // pred_check
        _
      $region10: #{tpu_custom_call.1} parent=5 // pred_check_branch
        %525 = sbr.rel (%p522) target = $region12
      $region11: #{tpu_custom_call.1} parent=5 // pred_region
        %s526 = ssub.s32 %s32, 1
      $region12: #{tpu_custom_call.1} parent=5 // pred_fallthru
        _
      %p527 = scmp.lt.s32.totalorder %s32, 4
      // Predicated region
      $region13: #{tpu_custom_call.1} parent=5 // pred_check
        %p528 = pneg %p527
      $region14: #{tpu_custom_call.1} parent=5 // pred_check_branch
        %530 = sbr.rel (%p528) target = $region16
      $region15: #{tpu_custom_call.1} parent=5 // pred_region
        // Predicated region
        $region17: #{tpu_custom_call.1} parent=15 // pred_check
          %p531 = pneg %p64
        $region18: #{tpu_custom_call.1} parent=15 // pred_check_branch
          %533 = sbr.rel (%p531) target = $region20
        $region19: #{tpu_custom_call.1} parent=15 // pred_region
          %s534 = sand.u32 %s54, 1
          %s535 = scalar_lea.sflag [#allocation4], %s534
          %s536 = sand.u32 %s54, 1
          %s537 = smul.addr %s536, 8
          %s538 = scalar_lea.vmem [#allocation3], %s537
          %s540 = ssub.s32 128, 128
          %541 = vsyncadd %s535, %s540
          %s542 = smul.addr %s39, 128
          %s543 = scalar_lea.hbm %s0, %s542
          %s545 = sshll.u32 %s538, 4
          %s546 = int_to_ptr.vmem [resolvable:$true] %s545
          %548 = dma.hbm_to_vmem [thread:$0]  %s543, 128, %s546, %s535
        $region20: #{tpu_custom_call.1} parent=15 // pred_fallthru
          _
        // Predicated region
        $region21: #{tpu_custom_call.1} parent=15 // pred_check
          %p549 = pneg %p90
        $region22: #{tpu_custom_call.1} parent=15 // pred_check_branch
          %551 = sbr.rel (%p549) target = $region24
        $region23: #{tpu_custom_call.1} parent=15 // pred_region
          %p552 = scmp.lt.s32.totalorder %s40, 1
          %s553 = scalar_select %p552, %s40, 1
          %s554 = smul.addr %s553, 4
          %s555 = smul.addr %s554, 8
          %s556 = scalar_lea.vmem %s1, %s555
        $region24: #{tpu_custom_call.1} parent=15 // pred_fallthru
          _
        // Predicated region
        $region25: #{tpu_custom_call.1} parent=15 // pred_check
          %p557 = pneg %p116
        $region26: #{tpu_custom_call.1} parent=15 // pred_check_branch
          %559 = sbr.rel (%p557) target = $region28
        $region27: #{tpu_custom_call.1} parent=15 // pred_region
          %p560 = scmp.lt.s32.totalorder %s40, 1
          %s561 = scalar_select %p560, %s40, 1
          %s562 = scalar_lea.vmem %s2, %s561
        $region28: #{tpu_custom_call.1} parent=15 // pred_fallthru
          _
        // Predicated region
        $region29: #{tpu_custom_call.1} parent=15 // pred_check
          %p563 = pneg %p142
        $region30: #{tpu_custom_call.1} parent=15 // pred_check_branch
          %565 = sbr.rel (%p563) target = $region32
        $region31: #{tpu_custom_call.1} parent=15 // pred_region
          %p566 = scmp.lt.s32.totalorder %s40, 1
          %s567 = scalar_select %p566, %s40, 1
          %s568 = smul.addr %s567, 4
          %s569 = smul.addr %s568, 8
          %s570 = scalar_lea.vmem %s3, %s569
        $region32: #{tpu_custom_call.1} parent=15 // pred_fallthru
          _
        // Predicated region
        $region33: #{tpu_custom_call.1} parent=15 // pred_check
          %p571 = pneg %p168
        $region34: #{tpu_custom_call.1} parent=15 // pred_check_branch
          %573 = sbr.rel (%p571) target = $region36
        $region35: #{tpu_custom_call.1} parent=15 // pred_region
          %p574 = scmp.lt.s32.totalorder %s40, 1
          %s575 = scalar_select %p574, %s40, 1
          %s576 = scalar_lea.vmem %s4, %s575
        $region36: #{tpu_custom_call.1} parent=15 // pred_fallthru
          _
        // Predicated region
        $region37: #{tpu_custom_call.1} parent=15 // pred_check
          %p577 = pneg %p194
        $region38: #{tpu_custom_call.1} parent=15 // pred_check_branch
          %579 = sbr.rel (%p577) target = $region40
        $region39: #{tpu_custom_call.1} parent=15 // pred_region
          %p580 = scmp.lt.s32.totalorder %s40, 1
          %s581 = scalar_select %p580, %s40, 1
          %s582 = smul.addr %s581, 4
          %s583 = smul.addr %s582, 8
          %s584 = scalar_lea.vmem %s5, %s583
        $region40: #{tpu_custom_call.1} parent=15 // pred_fallthru
          _
        // Predicated region
        $region41: #{tpu_custom_call.1} parent=15 // pred_check
          %p585 = pneg %p220
        $region42: #{tpu_custom_call.1} parent=15 // pred_check_branch
          %587 = sbr.rel (%p585) target = $region44
        $region43: #{tpu_custom_call.1} parent=15 // pred_region
          %p588 = scmp.lt.s32.totalorder %s40, 1
          %s589 = scalar_select %p588, %s40, 1
          %s590 = scalar_lea.vmem %s6, %s589
        $region44: #{tpu_custom_call.1} parent=15 // pred_fallthru
          _
        // Predicated region
        $region45: #{tpu_custom_call.1} parent=15 // pred_check
          %p591 = pneg %p246
        $region46: #{tpu_custom_call.1} parent=15 // pred_check_branch
          %593 = sbr.rel (%p591) target = $region48
        $region47: #{tpu_custom_call.1} parent=15 // pred_region
          %s594 = sand.u32 %s32, 1
          %s595 = scalar_lea.sflag [#allocation7], %s594
          %s596 = sand.u32 %s236, 1
          %s597 = smul.addr %s596, 32
          %s598 = scalar_lea.vmem [#allocation6], %s597
          %s600 = ssub.s32 512, 512
          %601 = vsyncadd %s595, %s600
          %s602 = smul.addr %s40, 4
          %s603 = smul.addr %s602, 128
          %s604 = scalar_lea.hbm %s7, %s603
          %s605 = sshll.u32 %s598, 4
          %s606 = int_to_ptr.vmem [resolvable:$true] %s605
          %611 = dma.hbm_to_vmem [thread:$0]  %s604, 512, %s606, %s595, 128, 128, 8
        $region48: #{tpu_custom_call.1} parent=15 // pred_fallthru
          _
        // Predicated region
        $region49: #{tpu_custom_call.1} parent=15 // pred_check
          %p612 = pneg %p272
        $region50: #{tpu_custom_call.1} parent=15 // pred_check_branch
          %614 = sbr.rel (%p612) target = $region52
        $region51: #{tpu_custom_call.1} parent=15 // pred_region
          %p615 = scmp.lt.s32.totalorder %s40, 1
          %s616 = scalar_select %p615, %s40, 1
          %s617 = scalar_lea.vmem %s8, %s616
        $region52: #{tpu_custom_call.1} parent=15 // pred_fallthru
          _
        // Predicated region
        $region53: #{tpu_custom_call.1} parent=15 // pred_check
          %p618 = pneg %p298
        $region54: #{tpu_custom_call.1} parent=15 // pred_check_branch
          %620 = sbr.rel (%p618) target = $region56
        $region55: #{tpu_custom_call.1} parent=15 // pred_region
          %s621 = sand.u32 %s32, 1
          %s622 = scalar_lea.sflag [#allocation7], %s621
          %s623 = sand.u32 %s288, 1
          %s624 = smul.addr %s623, 32
          %s625 = scalar_lea.vmem [#allocation8], %s624
          %s627 = ssub.s32 512, 512
          %628 = vsyncadd %s622, %s627
          %s629 = smul.addr %s40, 4
          %s630 = smul.addr %s629, 128
          %s631 = scalar_lea.hbm %s9, %s630
          %s632 = sshll.u32 %s625, 4
          %s633 = int_to_ptr.vmem [resolvable:$true] %s632
          %638 = dma.hbm_to_vmem [thread:$0]  %s631, 512, %s633, %s622, 128, 128, 8
        $region56: #{tpu_custom_call.1} parent=15 // pred_fallthru
          _
        // Predicated region
        $region57: #{tpu_custom_call.1} parent=15 // pred_check
          %p639 = pneg %p324
        $region58: #{tpu_custom_call.1} parent=15 // pred_check_branch
          %641 = sbr.rel (%p639) target = $region60
        $region59: #{tpu_custom_call.1} parent=15 // pred_region
          %p642 = scmp.lt.s32.totalorder %s40, 1
          %s643 = scalar_select %p642, %s40, 1
          %s644 = scalar_lea.vmem %s10, %s643
        $region60: #{tpu_custom_call.1} parent=15 // pred_fallthru
          _
        // Predicated region
        $region61: #{tpu_custom_call.1} parent=15 // pred_check
          %p645 = pneg %p350
        $region62: #{tpu_custom_call.1} parent=15 // pred_check_branch
          %647 = sbr.rel (%p645) target = $region64
        $region63: #{tpu_custom_call.1} parent=15 // pred_region
          %p648 = scmp.lt.s32.totalorder %s40, 1
          %s649 = scalar_select %p648, %s40, 1
          %s650 = smul.addr %s649, 8
          %s651 = smul.addr %s650, 8
          %s652 = scalar_lea.vmem %s11, %s651
        $region64: #{tpu_custom_call.1} parent=15 // pred_fallthru
          _
        // Predicated region
        $region65: #{tpu_custom_call.1} parent=15 // pred_check
          %p653 = pneg %p376
        $region66: #{tpu_custom_call.1} parent=15 // pred_check_branch
          %655 = sbr.rel (%p653) target = $region68
        $region67: #{tpu_custom_call.1} parent=15 // pred_region
          %p656 = scmp.lt.s32.totalorder %s40, 1
          %s657 = scalar_select %p656, %s40, 1
          %s658 = scalar_lea.vmem %s12, %s657
        $region68: #{tpu_custom_call.1} parent=15 // pred_fallthru
          _
        // Predicated region
        $region69: #{tpu_custom_call.1} parent=15 // pred_check
          %p659 = pneg %p402
        $region70: #{tpu_custom_call.1} parent=15 // pred_check_branch
          %661 = sbr.rel (%p659) target = $region72
        $region71: #{tpu_custom_call.1} parent=15 // pred_region
          %p662 = scmp.lt.s32.totalorder %s40, 1
          %s663 = scalar_select %p662, %s40, 1
          %s664 = scalar_lea.vmem %s13, %s663
        $region72: #{tpu_custom_call.1} parent=15 // pred_fallthru
          _
        // Predicated region
        $region73: #{tpu_custom_call.1} parent=15 // pred_check
          %p665 = pneg %p428
        $region74: #{tpu_custom_call.1} parent=15 // pred_check_branch
          %667 = sbr.rel (%p665) target = $region76
        $region75: #{tpu_custom_call.1} parent=15 // pred_region
          %p668 = scmp.lt.s32.totalorder %s40, 1
          %s669 = scalar_select %p668, %s40, 1
          %s670 = scalar_lea.vmem %s14, %s669
        $region76: #{tpu_custom_call.1} parent=15 // pred_fallthru
          _
        // Predicated region
        $region77: #{tpu_custom_call.1} parent=15 // pred_check
          %p671 = pneg %p454
        $region78: #{tpu_custom_call.1} parent=15 // pred_check_branch
          %673 = sbr.rel (%p671) target = $region80
        $region79: #{tpu_custom_call.1} parent=15 // pred_region
          %p674 = scmp.lt.s32.totalorder %s40, 1
          %s675 = scalar_select %p674, %s40, 1
          %s676 = scalar_lea.vmem %s15, %s675
        $region80: #{tpu_custom_call.1} parent=15 // pred_fallthru
          _
        // Predicated region
        $region81: #{tpu_custom_call.1} parent=15 // pred_check
          %p677 = pneg %p480
        $region82: #{tpu_custom_call.1} parent=15 // pred_check_branch
          %679 = sbr.rel (%p677) target = $region84
        $region83: #{tpu_custom_call.1} parent=15 // pred_region
          %p680 = scmp.lt.s32.totalorder %s40, 1
          %s681 = scalar_select %p680, %s40, 1
          %s682 = scalar_lea.vmem %s16, %s681
        $region84: #{tpu_custom_call.1} parent=15 // pred_fallthru
          _
      $region16: #{tpu_custom_call.1} parent=5 // pred_fallthru
        _
      %p683 = scmp.le.s32.totalorder 1, %s32
      %p684 = scmp.lt.s32.totalorder %s32, 5
      %p685 = pnand %p683, %p684
      %p686 = pneg %p685
      // Predicated region
      $region85: #{tpu_custom_call.1} parent=5 // pred_check
        _
      $region86: #{tpu_custom_call.1} parent=5 // pred_check_branch
        %688 = sbr.rel (%p685) target = $region88
      $region87: #{tpu_custom_call.1} parent=5 // pred_region
        %s689 = ssub.s32 %s32, 1
        %s690 = sand.u32 %s57, 1
        %s691 = scalar_lea.sflag [#allocation4], %s690
        %s692 = sand.u32 %s57, 1
        %s693 = smul.addr %s692, 8
        %s694 = scalar_lea.vmem [#allocation3], %s693
        // Predicated region
        $region89: #{tpu_custom_call.1} parent=87 // pred_check
          %p695 = pneg %p70
        $region90: #{tpu_custom_call.1} parent=87 // pred_check_branch
          %697 = sbr.rel (%p695) target = $region92
        $region91: #{tpu_custom_call.1} parent=87 // pred_region
          %698 = dma.done %s691, 128
        $region92: #{tpu_custom_call.1} parent=87 // pred_fallthru
          _
        %s699 = sand.u32 %s37, 1
        %s700 = scalar_lea.sflag [#allocation7], %s699
        %s701 = sand.u32 %s239, 1
        %s702 = smul.addr %s701, 32
        %s703 = scalar_lea.vmem [#allocation6], %s702
        // Predicated region
        $region93: #{tpu_custom_call.1} parent=87 // pred_check
          %p704 = pneg %p252
        $region94: #{tpu_custom_call.1} parent=87 // pred_check_branch
          %706 = sbr.rel (%p704) target = $region96
        $region95: #{tpu_custom_call.1} parent=87 // pred_region
          %707 = dma.done %s700, 512
        $region96: #{tpu_custom_call.1} parent=87 // pred_fallthru
          _
        %s708 = sand.u32 %s37, 1
        %s709 = scalar_lea.sflag [#allocation7], %s708
        %s710 = sand.u32 %s291, 1
        %s711 = smul.addr %s710, 32
        %s712 = scalar_lea.vmem [#allocation8], %s711
        // Predicated region
        $region97: #{tpu_custom_call.1} parent=87 // pred_check
          %p713 = pneg %p304
        $region98: #{tpu_custom_call.1} parent=87 // pred_check_branch
          %715 = sbr.rel (%p713) target = $region100
        $region99: #{tpu_custom_call.1} parent=87 // pred_region
          %716 = dma.done %s709, 512
        $region100: #{tpu_custom_call.1} parent=87 // pred_fallthru
          _
        %s717 = sand.u32 %s57, 1
        %s718 = scalar_lea.sflag [#allocation4], %s717
        %s719 = sand.u32 %s57, 1
        %s720 = smul.addr %s719, 8
        %s721 = scalar_lea.vmem [#allocation3], %s720
        %p722 = pneg %p70
        %p723 = pneg %p67
        %p724 = scmp.lt.s32.totalorder %s42, 1
        %s725 = scalar_select %p724, %s42, 1
        %s726 = smul.addr %s725, 4
        %s727 = smul.addr %s726, 8
        %s728 = scalar_lea.vmem %s1, %s727
        %p729 = pneg %p96
        %p730 = pneg %p93
        %p731 = scmp.lt.s32.totalorder %s42, 1
        %s732 = scalar_select %p731, %s42, 1
        %s733 = scalar_lea.vmem %s2, %s732
        %p734 = pneg %p122
        %p735 = pneg %p119
        %p736 = scmp.lt.s32.totalorder %s42, 1
        %s737 = scalar_select %p736, %s42, 1
        %s738 = smul.addr %s737, 4
        %s739 = smul.addr %s738, 8
        %s740 = scalar_lea.vmem %s3, %s739
        %p741 = pneg %p148
        %p742 = pneg %p145
        %p743 = scmp.lt.s32.totalorder %s42, 1
        %s744 = scalar_select %p743, %s42, 1
        %s745 = scalar_lea.vmem %s4, %s744
        %p746 = pneg %p174
        %p747 = pneg %p171
        %p748 = scmp.lt.s32.totalorder %s42, 1
        %s749 = scalar_select %p748, %s42, 1
        %s750 = smul.addr %s749, 4
        %s751 = smul.addr %s750, 8
        %s752 = scalar_lea.vmem %s5, %s751
        %p753 = pneg %p200
        %p754 = pneg %p197
        %p755 = scmp.lt.s32.totalorder %s42, 1
        %s756 = scalar_select %p755, %s42, 1
        %s757 = scalar_lea.vmem %s6, %s756
        %p758 = pneg %p226
        %p759 = pneg %p223
        %s760 = sand.u32 %s37, 1
        %s761 = scalar_lea.sflag [#allocation7], %s760
        %s762 = sand.u32 %s239, 1
        %s763 = smul.addr %s762, 32
        %s764 = scalar_lea.vmem [#allocation6], %s763
        %p765 = pneg %p252
        %p766 = pneg %p249
        %p767 = scmp.lt.s32.totalorder %s42, 1
        %s768 = scalar_select %p767, %s42, 1
        %s769 = scalar_lea.vmem %s8, %s768
        %p770 = pneg %p278
        %p771 = pneg %p275
        %s772 = sand.u32 %s37, 1
        %s773 = scalar_lea.sflag [#allocation7], %s772
        %s774 = sand.u32 %s291, 1
        %s775 = smul.addr %s774, 32
        %s776 = scalar_lea.vmem [#allocation8], %s775
        %p777 = pneg %p304
        %p778 = pneg %p301
        %p779 = scmp.lt.s32.totalorder %s42, 1
        %s780 = scalar_select %p779, %s42, 1
        %s781 = scalar_lea.vmem %s10, %s780
        %p782 = pneg %p330
        %p783 = pneg %p327
        %p784 = scmp.lt.s32.totalorder %s42, 1
        %s785 = scalar_select %p784, %s42, 1
        %s786 = smul.addr %s785, 8
        %s787 = smul.addr %s786, 8
        %s788 = scalar_lea.vmem %s11, %s787
        %p789 = pneg %p356
        %p790 = pneg %p353
        %p791 = scmp.lt.s32.totalorder %s42, 1
        %s792 = scalar_select %p791, %s42, 1
        %s793 = scalar_lea.vmem %s12, %s792
        %p794 = pneg %p382
        %p795 = pneg %p379
        %p796 = scmp.lt.s32.totalorder %s42, 1
        %s797 = scalar_select %p796, %s42, 1
        %s798 = scalar_lea.vmem %s13, %s797
        %p799 = pneg %p408
        %p800 = pneg %p405
        %p801 = scmp.lt.s32.totalorder %s42, 1
        %s802 = scalar_select %p801, %s42, 1
        %s803 = scalar_lea.vmem %s14, %s802
        %p804 = pneg %p434
        %p805 = pneg %p431
        %p806 = scmp.lt.s32.totalorder %s42, 1
        %s807 = scalar_select %p806, %s42, 1
        %s808 = scalar_lea.vmem %s15, %s807
        %p809 = pneg %p460
        %p810 = pneg %p457
        %p811 = scmp.lt.s32.totalorder %s42, 1
        %s812 = scalar_select %p811, %s42, 1
        %s813 = scalar_lea.vmem %s16, %s812
        %p814 = pneg %p486
        %p815 = pneg %p483
        %p816 = pneg %p512
        %p817 = pneg %p509
        %s818 = sand.u32 %s499, 1
        %s819 = scalar_lea.sflag [#allocation5], %s818
        %s820 = sand.u32 %s499, 1
        %s821 = smul.addr %s820, 8
        %s822 = scalar_lea.vmem [#allocation9], %s821
        %p823 = scmp.lt.s32.totalorder %s42, 1
        %s824 = scalar_select %p823, %s42, 1
        %s825 = smul.addr %s824, 4
        %s826 = smul.addr %s825, 8
        %s827 = scalar_lea.vmem %s1, %s826
        %p828 = scmp.lt.s32.totalorder %s42, 1
        %s829 = scalar_select %p828, %s42, 1
        %s830 = scalar_lea.vmem %s2, %s829
        %p831 = scmp.lt.s32.totalorder %s42, 1
        %s832 = scalar_select %p831, %s42, 1
        %s833 = smul.addr %s832, 4
        %s834 = smul.addr %s833, 8
        %s835 = scalar_lea.vmem %s3, %s834
        %p836 = scmp.lt.s32.totalorder %s42, 1
        %s837 = scalar_select %p836, %s42, 1
        %s838 = scalar_lea.vmem %s4, %s837
        %p839 = scmp.lt.s32.totalorder %s42, 1
        %s840 = scalar_select %p839, %s42, 1
        %s841 = smul.addr %s840, 4
        %s842 = smul.addr %s841, 8
        %s843 = scalar_lea.vmem %s5, %s842
        %p844 = scmp.lt.s32.totalorder %s42, 1
        %s845 = scalar_select %p844, %s42, 1
        %s846 = scalar_lea.vmem %s6, %s845
        %p847 = scmp.lt.s32.totalorder %s42, 1
        %s848 = scalar_select %p847, %s42, 1
        %s849 = scalar_lea.vmem %s8, %s848
        %p850 = scmp.lt.s32.totalorder %s42, 1
        %s851 = scalar_select %p850, %s42, 1
        %s852 = scalar_lea.vmem %s10, %s851
        %p853 = scmp.lt.s32.totalorder %s42, 1
        %s854 = scalar_select %p853, %s42, 1
        %s855 = smul.addr %s854, 8
        %s856 = smul.addr %s855, 8
        %s857 = scalar_lea.vmem %s11, %s856
        %p858 = scmp.lt.s32.totalorder %s42, 1
        %s859 = scalar_select %p858, %s42, 1
        %s860 = scalar_lea.vmem %s12, %s859
        %p861 = scmp.lt.s32.totalorder %s42, 1
        %s862 = scalar_select %p861, %s42, 1
        %s863 = scalar_lea.vmem %s13, %s862
        %p864 = scmp.lt.s32.totalorder %s42, 1
        %s865 = scalar_select %p864, %s42, 1
        %s866 = scalar_lea.vmem %s14, %s865
        %p867 = scmp.lt.s32.totalorder %s42, 1
        %s868 = scalar_select %p867, %s42, 1
        %s869 = scalar_lea.vmem %s15, %s868
        %p870 = scmp.lt.s32.totalorder %s42, 1
        %s871 = scalar_select %p870, %s42, 1
        %s872 = scalar_lea.vmem %s16, %s871
        %p873 = scmp.eq.s32.totalorder %s42, 0
        // Predicated region
        $region101: #{tpu_custom_call.1} parent=87 // pred_check
          %p874 = pneg %p873
        $region102: #{tpu_custom_call.1} parent=87 // pred_check_branch
          %876 = sbr.rel (%p874) target = $region104
        $region103: #{tpu_custom_call.1} parent=87 // pred_region
          %v877 = vld [vmem:[%s694] sm:$0xff]
          %vm878 = vcmask 261120
          %879 = vst.msk [vmem:[#allocation2] sm:$0xff] %vm878, %v877
        $region104: #{tpu_custom_call.1} parent=87 // pred_fallthru
          _
        %v880 = vld [vmem:[#allocation2] sm:$0xff]
        %v881 = vld [vmem:[%s827] sm:$0xff]
        %v882 = vld [vmem:[%s827 + $0x8] sm:$0xff]
        %v883 = vld [vmem:[%s827 + $0x10] sm:$0xff]
        %v884 = vld [vmem:[%s827 + $0x18] sm:$0xff]
        %v885 = vld [vmem:[%s835] sm:$0xff]
        %v886 = vld [vmem:[%s835 + $0x8] sm:$0xff]
        %v887 = vld [vmem:[%s835 + $0x10] sm:$0xff]
        %v888 = vld [vmem:[%s835 + $0x18] sm:$0xff]
        %v889 = vld [vmem:[%s843] sm:$0xff]
        %v890 = vld [vmem:[%s843 + $0x8] sm:$0xff]
        %v891 = vld [vmem:[%s843 + $0x10] sm:$0xff]
        %v892 = vld [vmem:[%s843 + $0x18] sm:$0xff]
        %v893 = vld [vmem:[%s703] sm:$0xff]
        %v894 = vld [vmem:[%s703 + $0x8] sm:$0xff]
        %v895 = vld [vmem:[%s703 + $0x10] sm:$0xff]
        %v896 = vld [vmem:[%s703 + $0x18] sm:$0xff]
        %v897 = vld [vmem:[%s830] sm:$0x1]
        %v898 = vld [vmem:[%s838] sm:$0x1]
        %v899 = vld [vmem:[%s846] sm:$0x1]
        %v900 = vld [vmem:[%s849] sm:$0x1]
        %v902 = vlaneseq
        %v903 = vshrl.u32 %v902, 7
        %v904 = vsub.s32 0, %v903
        %v905 = vrot.slane %v897, %v904
        %vm907 = vcmask 261120
        %v909 = vsel %vm907, %v880, 0
        %911 = vmatprep.subr.mxu0 0.0
        %912 = vmatpush1.msra.mxu0 0.0
        %913 = vmatprep.subr.mxu0 0.0
        %914 = vmatpush1.msra.mxu0 0.0
        %915 = vmatprep.subr.mxu0 0.0
        %916 = vmatpush1.msra.mxu0 0.0
        %917 = vmatprep.subr.mxu0 0.0
        %918 = vmatpush1.msra.mxu0 0.0
        %919 = vmatprep.subr.mxu0 0.0
        %920 = vmatpush1.msra.mxu0 0.0
        %921 = vmatprep.subr.mxu0 0.0
        %922 = vmatpush1.msra.mxu0 0.0
        %923 = vmatprep.subr.mxu0 0.0
        %924 = vmatpush1.msra.mxu0 0.0
        %925 = vmatprep.subr.mxu0 0.0
        %926 = vmatpush1.msra.mxu0 0.0
        %927 = vmatprep.subr.mxu0 0.0
        %928 = vmatpush1.msra.mxu0 0.0
        %929 = vmatprep.subr.mxu0 0.0
        %930 = vmatpush1.msra.mxu0 0.0
        %931 = vmatprep.subr.mxu0 0.0
        %932 = vmatpush1.msra.mxu0 0.0
        %933 = vmatprep.subr.mxu0 0.0
        %934 = vmatpush1.msra.mxu0 0.0
        %935 = vmatprep.subr.mxu0 0.0
        %936 = vmatpush1.msra.mxu0 %v884
        %937 = vmatprep.subr.mxu0 0.0
        %938 = vmatpush1.msra.mxu0 %v883
        %939 = vmatprep.subr.mxu0 0.0
        %940 = vmatpush1.msra.mxu0 %v882
        %941 = vmatprep.subr.mxu0 0.0
        %942 = vmatpush1.msra.mxu0 %v881
        %943 = vmatprep.subr.mxu0 0.0
        %944 = vmatpush2.msra.mxu0 0.0
        %945 = vmatprep.subr.mxu0 0.0
        %946 = vmatpush2.msra.mxu0 0.0
        %947 = vmatprep.subr.mxu0 0.0
        %948 = vmatpush2.msra.mxu0 0.0
        %949 = vmatprep.subr.mxu0 0.0
        %950 = vmatpush2.msra.mxu0 0.0
        %951 = vmatprep.subr.mxu0 0.0
        %952 = vmatpush2.msra.mxu0 0.0
        %953 = vmatprep.subr.mxu0 0.0
        %954 = vmatpush2.msra.mxu0 0.0
        %955 = vmatprep.subr.mxu0 0.0
        %956 = vmatpush2.msra.mxu0 0.0
        %957 = vmatprep.subr.mxu0 0.0
        %958 = vmatpush2.msra.mxu0 0.0
        %959 = vmatprep.subr.mxu0 0.0
        %960 = vmatpush2.msra.mxu0 0.0
        %961 = vmatprep.subr.mxu0 0.0
        %962 = vmatpush2.msra.mxu0 0.0
        %963 = vmatprep.subr.mxu0 0.0
        %964 = vmatpush2.msra.mxu0 0.0
        %965 = vmatprep.subr.mxu0 0.0
        %966 = vmatpush2.msra.mxu0 0.0
        %967 = vmatprep.subr.mxu0 0.0
        %968 = vmatpush2.msra.mxu0 0.0
        %969 = vmatprep.subr.mxu0 0.0
        %970 = vmatpush2.msra.mxu0 0.0
        %971 = vmatprep.subr.mxu0 0.0
        %972 = vmatpush2.msra.mxu0 0.0
        %973 = vmatprep.subr.mxu0 0.0
        %974 = vmatpush2.msra.mxu0 0.0
        %975 = vmatprep.mubr.f32.mxu0 0.0
        %976 = vmatmul.mubr.f32.gmra.mxu0 %v909
        %v977 = vpop.f32.mrf.mxu0
        %v978 = vadd.f32 %v905, %v977
        %v979 = vpop.f32.mrf.mxu0
        %980 = vdwg.mxu0
        %v982 = vlaneseq
        %v983 = vshrl.u32 %v982, 7
        %v984 = vsub.s32 0, %v983
        %v985 = vrot.slane %v898, %v984
        %987 = vmatprep.subr.mxu0 0.0
        %988 = vmatpush1.msra.mxu0 0.0
        %989 = vmatprep.subr.mxu0 0.0
        %990 = vmatpush1.msra.mxu0 0.0
        %991 = vmatprep.subr.mxu0 0.0
        %992 = vmatpush1.msra.mxu0 0.0
        %993 = vmatprep.subr.mxu0 0.0
        %994 = vmatpush1.msra.mxu0 0.0
        %995 = vmatprep.subr.mxu0 0.0
        %996 = vmatpush1.msra.mxu0 0.0
        %997 = vmatprep.subr.mxu0 0.0
        %998 = vmatpush1.msra.mxu0 0.0
        %999 = vmatprep.subr.mxu0 0.0
        %1000 = vmatpush1.msra.mxu0 0.0
        %1001 = vmatprep.subr.mxu0 0.0
        %1002 = vmatpush1.msra.mxu0 0.0
        %1003 = vmatprep.subr.mxu0 0.0
        %1004 = vmatpush1.msra.mxu0 0.0
        %1005 = vmatprep.subr.mxu0 0.0
        %1006 = vmatpush1.msra.mxu0 0.0
        %1007 = vmatprep.subr.mxu0 0.0
        %1008 = vmatpush1.msra.mxu0 0.0
        %1009 = vmatprep.subr.mxu0 0.0
        %1010 = vmatpush1.msra.mxu0 0.0
        %1011 = vmatprep.subr.mxu0 0.0
        %1012 = vmatpush1.msra.mxu0 %v888
        %1013 = vmatprep.subr.mxu0 0.0
        %1014 = vmatpush1.msra.mxu0 %v887
        %1015 = vmatprep.subr.mxu0 0.0
        %1016 = vmatpush1.msra.mxu0 %v886
        %1017 = vmatprep.subr.mxu0 0.0
        %1018 = vmatpush1.msra.mxu0 %v885
        %1019 = vmatprep.subr.mxu0 0.0
        %1020 = vmatpush2.msra.mxu0 0.0
        %1021 = vmatprep.subr.mxu0 0.0
        %1022 = vmatpush2.msra.mxu0 0.0
        %1023 = vmatprep.subr.mxu0 0.0
        %1024 = vmatpush2.msra.mxu0 0.0
        %1025 = vmatprep.subr.mxu0 0.0
        %1026 = vmatpush2.msra.mxu0 0.0
        %1027 = vmatprep.subr.mxu0 0.0
        %1028 = vmatpush2.msra.mxu0 0.0
        %1029 = vmatprep.subr.mxu0 0.0
        %1030 = vmatpush2.msra.mxu0 0.0
        %1031 = vmatprep.subr.mxu0 0.0
        %1032 = vmatpush2.msra.mxu0 0.0
        %1033 = vmatprep.subr.mxu0 0.0
        %1034 = vmatpush2.msra.mxu0 0.0
        %1035 = vmatprep.subr.mxu0 0.0
        %1036 = vmatpush2.msra.mxu0 0.0
        %1037 = vmatprep.subr.mxu0 0.0
        %1038 = vmatpush2.msra.mxu0 0.0
        %1039 = vmatprep.subr.mxu0 0.0
        %1040 = vmatpush2.msra.mxu0 0.0
        %1041 = vmatprep.subr.mxu0 0.0
        %1042 = vmatpush2.msra.mxu0 0.0
        %1043 = vmatprep.subr.mxu0 0.0
        %1044 = vmatpush2.msra.mxu0 0.0
        %1045 = vmatprep.subr.mxu0 0.0
        %1046 = vmatpush2.msra.mxu0 0.0
        %1047 = vmatprep.subr.mxu0 0.0
        %1048 = vmatpush2.msra.mxu0 0.0
        %1049 = vmatprep.subr.mxu0 0.0
        %1050 = vmatpush2.msra.mxu0 0.0
        %1051 = vmatprep.mubr.f32.mxu0 0.0
        %1052 = vmatmul.mubr.f32.gmra.mxu0 %v909
        %v1053 = vpop.f32.mrf.mxu0
        %v1054 = vadd.f32 %v985, %v1053
        %v1055 = vpop.f32.mrf.mxu0
        %1056 = vdwg.mxu0
        %v1058 = vlaneseq
        %v1059 = vshrl.u32 %v1058, 7
        %v1060 = vsub.s32 0, %v1059
        %v1061 = vrot.slane %v899, %v1060
        %1063 = vmatprep.subr.mxu0 0.0
        %1064 = vmatpush1.msra.mxu0 0.0
        %1065 = vmatprep.subr.mxu0 0.0
        %1066 = vmatpush1.msra.mxu0 0.0
        %1067 = vmatprep.subr.mxu0 0.0
        %1068 = vmatpush1.msra.mxu0 0.0
        %1069 = vmatprep.subr.mxu0 0.0
        %1070 = vmatpush1.msra.mxu0 0.0
        %1071 = vmatprep.subr.mxu0 0.0
        %1072 = vmatpush1.msra.mxu0 0.0
        %1073 = vmatprep.subr.mxu0 0.0
        %1074 = vmatpush1.msra.mxu0 0.0
        %1075 = vmatprep.subr.mxu0 0.0
        %1076 = vmatpush1.msra.mxu0 0.0
        %1077 = vmatprep.subr.mxu0 0.0
        %1078 = vmatpush1.msra.mxu0 0.0
        %1079 = vmatprep.subr.mxu0 0.0
        %1080 = vmatpush1.msra.mxu0 0.0
        %1081 = vmatprep.subr.mxu0 0.0
        %1082 = vmatpush1.msra.mxu0 0.0
        %1083 = vmatprep.subr.mxu0 0.0
        %1084 = vmatpush1.msra.mxu0 0.0
        %1085 = vmatprep.subr.mxu0 0.0
        %1086 = vmatpush1.msra.mxu0 0.0
        %1087 = vmatprep.subr.mxu0 0.0
        %1088 = vmatpush1.msra.mxu0 %v892
        %1089 = vmatprep.subr.mxu0 0.0
        %1090 = vmatpush1.msra.mxu0 %v891
        %1091 = vmatprep.subr.mxu0 0.0
        %1092 = vmatpush1.msra.mxu0 %v890
        %1093 = vmatprep.subr.mxu0 0.0
        %1094 = vmatpush1.msra.mxu0 %v889
        %1095 = vmatprep.subr.mxu0 0.0
        %1096 = vmatpush2.msra.mxu0 0.0
        %1097 = vmatprep.subr.mxu0 0.0
        %1098 = vmatpush2.msra.mxu0 0.0
        %1099 = vmatprep.subr.mxu0 0.0
        %1100 = vmatpush2.msra.mxu0 0.0
        %1101 = vmatprep.subr.mxu0 0.0
        %1102 = vmatpush2.msra.mxu0 0.0
        %1103 = vmatprep.subr.mxu0 0.0
        %1104 = vmatpush2.msra.mxu0 0.0
        %1105 = vmatprep.subr.mxu0 0.0
        %1106 = vmatpush2.msra.mxu0 0.0
        %1107 = vmatprep.subr.mxu0 0.0
        %1108 = vmatpush2.msra.mxu0 0.0
        %1109 = vmatprep.subr.mxu0 0.0
        %1110 = vmatpush2.msra.mxu0 0.0
        %1111 = vmatprep.subr.mxu0 0.0
        %1112 = vmatpush2.msra.mxu0 0.0
        %1113 = vmatprep.subr.mxu0 0.0
        %1114 = vmatpush2.msra.mxu0 0.0
        %1115 = vmatprep.subr.mxu0 0.0
        %1116 = vmatpush2.msra.mxu0 0.0
        %1117 = vmatprep.subr.mxu0 0.0
        %1118 = vmatpush2.msra.mxu0 0.0
        %1119 = vmatprep.subr.mxu0 0.0
        %1120 = vmatpush2.msra.mxu0 0.0
        %1121 = vmatprep.subr.mxu0 0.0
        %1122 = vmatpush2.msra.mxu0 0.0
        %1123 = vmatprep.subr.mxu0 0.0
        %1124 = vmatpush2.msra.mxu0 0.0
        %1125 = vmatprep.subr.mxu0 0.0
        %1126 = vmatpush2.msra.mxu0 0.0
        %1127 = vmatprep.mubr.f32.mxu0 0.0
        %1128 = vmatmul.mubr.f32.gmra.mxu0 %v909
        %v1129 = vpop.f32.mrf.mxu0
        %v1130 = vadd.f32 %v1061, %v1129
        %v1131 = vpop.f32.mrf.mxu0
        %1132 = vdwg.mxu0
        %vm1133 = vcmask 64512
        %v1135 = vsel %vm1133, %v978, 0
        %v1138 = vsel %vm1133, %v1054, 0
        %1140 = vmatprep.subr.mxu0 0.0
        %1141 = vmatpush1.xpose.msra.mxu0 0.0
        %1142 = vmatprep.subr.mxu0 0.0
        %1143 = vmatpush1.xpose.msra.mxu0 0.0
        %1144 = vmatprep.subr.mxu0 0.0
        %1145 = vmatpush1.xpose.msra.mxu0 0.0
        %1146 = vmatprep.subr.mxu0 0.0
        %1147 = vmatpush1.xpose.msra.mxu0 0.0
        %1148 = vmatprep.subr.mxu0 0.0
        %1149 = vmatpush1.xpose.msra.mxu0 0.0
        %1150 = vmatprep.subr.mxu0 0.0
        %1151 = vmatpush1.xpose.msra.mxu0 0.0
        %1152 = vmatprep.subr.mxu0 0.0
        %1153 = vmatpush1.xpose.msra.mxu0 0.0
        %1154 = vmatprep.subr.mxu0 0.0
        %1155 = vmatpush1.xpose.msra.mxu0 0.0
        %1156 = vmatprep.subr.mxu0 0.0
        %1157 = vmatpush1.xpose.msra.mxu0 0.0
        %1158 = vmatprep.subr.mxu0 0.0
        %1159 = vmatpush1.xpose.msra.mxu0 0.0
        %1160 = vmatprep.subr.mxu0 0.0
        %1161 = vmatpush1.xpose.msra.mxu0 0.0
        %1162 = vmatprep.subr.mxu0 0.0
        %1163 = vmatpush1.xpose.msra.mxu0 0.0
        %1164 = vmatprep.subr.mxu0 0.0
        %1165 = vmatpush1.xpose.msra.mxu0 0.0
        %1166 = vmatprep.subr.mxu0 0.0
        %1167 = vmatpush1.xpose.msra.mxu0 0.0
        %1168 = vmatprep.subr.mxu0 0.0
        %1169 = vmatpush1.xpose.msra.mxu0 0.0
        %1170 = vmatprep.subr.mxu0 0.0
        %1171 = vmatpush1.xpose.msra.mxu0 %v1138
        %1172 = vmatprep.subr.mxu0 0.0
        %1173 = vmatpush2.xpose.msra.mxu0 0.0
        %1174 = vmatprep.subr.mxu0 0.0
        %1175 = vmatpush2.xpose.msra.mxu0 0.0
        %1176 = vmatprep.subr.mxu0 0.0
        %1177 = vmatpush2.xpose.msra.mxu0 0.0
        %1178 = vmatprep.subr.mxu0 0.0
        %1179 = vmatpush2.xpose.msra.mxu0 0.0
        %1180 = vmatprep.subr.mxu0 0.0
        %1181 = vmatpush2.xpose.msra.mxu0 0.0
        %1182 = vmatprep.subr.mxu0 0.0
        %1183 = vmatpush2.xpose.msra.mxu0 0.0
        %1184 = vmatprep.subr.mxu0 0.0
        %1185 = vmatpush2.xpose.msra.mxu0 0.0
        %1186 = vmatprep.subr.mxu0 0.0
        %1187 = vmatpush2.xpose.msra.mxu0 0.0
        %1188 = vmatprep.subr.mxu0 0.0
        %1189 = vmatpush2.xpose.msra.mxu0 0.0
        %1190 = vmatprep.subr.mxu0 0.0
        %1191 = vmatpush2.xpose.msra.mxu0 0.0
        %1192 = vmatprep.subr.mxu0 0.0
        %1193 = vmatpush2.xpose.msra.mxu0 0.0
        %1194 = vmatprep.subr.mxu0 0.0
        %1195 = vmatpush2.xpose.msra.mxu0 0.0
        %1196 = vmatprep.subr.mxu0 0.0
        %1197 = vmatpush2.xpose.msra.mxu0 0.0
        %1198 = vmatprep.subr.mxu0 0.0
        %1199 = vmatpush2.xpose.msra.mxu0 0.0
        %1200 = vmatprep.subr.mxu0 0.0
        %1201 = vmatpush2.xpose.msra.mxu0 0.0
        %1202 = vmatprep.subr.mxu0 0.0
        %1203 = vmatpush2.xpose.msra.mxu0 0.0
        %1204 = vmatprep.mubr.f32.mxu0 0.0
        %1205 = vmatmul.mubr.f32.gmra.mxu0 %v1135
        %v1206 = vpop.f32.mrf.mxu0
        %v1207 = vadd.f32 0.0, %v1206
        %v1208 = vpop.f32.mrf.mxu0
        %1209 = vdwg.mxu0
        %v1210 = vmul.f32 %v1207, 0.35355338
        %v1211 = vsel %vm1133, %v1210, -inf
        %1212 = vmax.xlane.f32.xlu0 %v1211
        %v1213 = vpop.xlane.xlu0 %1212
        %v1214 = vsub.f32 %v1210, %v1213
        %v1215 = vmul.f32 %v1214, 1.442695
        %v1216 = vpow.pop %v1215
        %v1217 = vsel %vm1133, %v1216, 0.0
        %1218 = vadd.xlane.f32.xlu0 %v1217
        %v1219 = vpop.xlane.xlu0 %1218
        %v1220 = vrcp.pop %v1219
        %v1221 = vmul.f32 %v1216, %v1220
        %v1223 = vsel %vm1133, %v1221, 0
        %1225 = vmatprep.subr.mxu0 0.0
        %1226 = vmatpush1.msra.mxu0 0.0
        %1227 = vmatprep.subr.mxu0 0.0
        %1228 = vmatpush1.msra.mxu0 0.0
        %1229 = vmatprep.subr.mxu0 0.0
        %1230 = vmatpush1.msra.mxu0 0.0
        %1231 = vmatprep.subr.mxu0 0.0
        %1232 = vmatpush1.msra.mxu0 0.0
        %1233 = vmatprep.subr.mxu0 0.0
        %1234 = vmatpush1.msra.mxu0 0.0
        %1235 = vmatprep.subr.mxu0 0.0
        %1236 = vmatpush1.msra.mxu0 0.0
        %1237 = vmatprep.subr.mxu0 0.0
        %1238 = vmatpush1.msra.mxu0 0.0
        %1239 = vmatprep.subr.mxu0 0.0
        %1240 = vmatpush1.msra.mxu0 0.0
        %1241 = vmatprep.subr.mxu0 0.0
        %1242 = vmatpush1.msra.mxu0 0.0
        %1243 = vmatprep.subr.mxu0 0.0
        %1244 = vmatpush1.msra.mxu0 0.0
        %1245 = vmatprep.subr.mxu0 0.0
        %1246 = vmatpush1.msra.mxu0 0.0
        %1247 = vmatprep.subr.mxu0 0.0
        %1248 = vmatpush1.msra.mxu0 0.0
        %1249 = vmatprep.subr.mxu0 0.0
        %1250 = vmatpush1.msra.mxu0 0.0
        %1251 = vmatprep.subr.mxu0 0.0
        %1252 = vmatpush1.msra.mxu0 0.0
        %1253 = vmatprep.subr.mxu0 0.0
        %1254 = vmatpush1.msra.mxu0 0.0
        %1255 = vmatprep.subr.mxu0 0.0
        %1256 = vmatpush1.msra.mxu0 %v1130
        %1257 = vmatprep.subr.mxu0 0.0
        %1258 = vmatpush2.msra.mxu0 0.0
        %1259 = vmatprep.subr.mxu0 0.0
        %1260 = vmatpush2.msra.mxu0 0.0
        %1261 = vmatprep.subr.mxu0 0.0
        %1262 = vmatpush2.msra.mxu0 0.0
        %1263 = vmatprep.subr.mxu0 0.0
        %1264 = vmatpush2.msra.mxu0 0.0
        %1265 = vmatprep.subr.mxu0 0.0
        %1266 = vmatpush2.msra.mxu0 0.0
        %1267 = vmatprep.subr.mxu0 0.0
        %1268 = vmatpush2.msra.mxu0 0.0
        %1269 = vmatprep.subr.mxu0 0.0
        %1270 = vmatpush2.msra.mxu0 0.0
        %1271 = vmatprep.subr.mxu0 0.0
        %1272 = vmatpush2.msra.mxu0 0.0
        %1273 = vmatprep.subr.mxu0 0.0
        %1274 = vmatpush2.msra.mxu0 0.0
        %1275 = vmatprep.subr.mxu0 0.0
        %1276 = vmatpush2.msra.mxu0 0.0
        %1277 = vmatprep.subr.mxu0 0.0
        %1278 = vmatpush2.msra.mxu0 0.0
        %1279 = vmatprep.subr.mxu0 0.0
        %1280 = vmatpush2.msra.mxu0 0.0
        %1281 = vmatprep.subr.mxu0 0.0
        %1282 = vmatpush2.msra.mxu0 0.0
        %1283 = vmatprep.subr.mxu0 0.0
        %1284 = vmatpush2.msra.mxu0 0.0
        %1285 = vmatprep.subr.mxu0 0.0
        %1286 = vmatpush2.msra.mxu0 0.0
        %1287 = vmatprep.subr.mxu0 0.0
        %1288 = vmatpush2.msra.mxu0 0.0
        %1289 = vmatprep.mubr.f32.mxu0 0.0
        %1290 = vmatmul.mubr.f32.gmra.mxu0 %v1223
        %v1291 = vpop.f32.mrf.mxu0
        %v1292 = vadd.f32 0.0, %v1291
        %v1293 = vpop.f32.mrf.mxu0
        %1294 = vdwg.mxu0
        %1295 = vrot.lane.b32.xlu0 %v978, 120
        %v1296 = vpop.permute.xlu0 %1295
        %1297 = vrot.lane.b32.xlu0 %v1054, 120
        %v1298 = vpop.permute.xlu0 %1297
        %v1299 = vsel %vm1133, %v1296, 0
        %v1301 = vsel %vm1133, %v1298, 0
        %1303 = vmatprep.subr.mxu0 0.0
        %1304 = vmatpush1.xpose.msra.mxu0 0.0
        %1305 = vmatprep.subr.mxu0 0.0
        %1306 = vmatpush1.xpose.msra.mxu0 0.0
        %1307 = vmatprep.subr.mxu0 0.0
        %1308 = vmatpush1.xpose.msra.mxu0 0.0
        %1309 = vmatprep.subr.mxu0 0.0
        %1310 = vmatpush1.xpose.msra.mxu0 0.0
        %1311 = vmatprep.subr.mxu0 0.0
        %1312 = vmatpush1.xpose.msra.mxu0 0.0
        %1313 = vmatprep.subr.mxu0 0.0
        %1314 = vmatpush1.xpose.msra.mxu0 0.0
        %1315 = vmatprep.subr.mxu0 0.0
        %1316 = vmatpush1.xpose.msra.mxu0 0.0
        %1317 = vmatprep.subr.mxu0 0.0
        %1318 = vmatpush1.xpose.msra.mxu0 0.0
        %1319 = vmatprep.subr.mxu0 0.0
        %1320 = vmatpush1.xpose.msra.mxu0 0.0
        %1321 = vmatprep.subr.mxu0 0.0
        %1322 = vmatpush1.xpose.msra.mxu0 0.0
        %1323 = vmatprep.subr.mxu0 0.0
        %1324 = vmatpush1.xpose.msra.mxu0 0.0
        %1325 = vmatprep.subr.mxu0 0.0
        %1326 = vmatpush1.xpose.msra.mxu0 0.0
        %1327 = vmatprep.subr.mxu0 0.0
        %1328 = vmatpush1.xpose.msra.mxu0 0.0
        %1329 = vmatprep.subr.mxu0 0.0
        %1330 = vmatpush1.xpose.msra.mxu0 0.0
        %1331 = vmatprep.subr.mxu0 0.0
        %1332 = vmatpush1.xpose.msra.mxu0 0.0
        %1333 = vmatprep.subr.mxu0 0.0
        %1334 = vmatpush1.xpose.msra.mxu0 %v1301
        %1335 = vmatprep.subr.mxu0 0.0
        %1336 = vmatpush2.xpose.msra.mxu0 0.0
        %1337 = vmatprep.subr.mxu0 0.0
        %1338 = vmatpush2.xpose.msra.mxu0 0.0
        %1339 = vmatprep.subr.mxu0 0.0
        %1340 = vmatpush2.xpose.msra.mxu0 0.0
        %1341 = vmatprep.subr.mxu0 0.0
        %1342 = vmatpush2.xpose.msra.mxu0 0.0
        %1343 = vmatprep.subr.mxu0 0.0
        %1344 = vmatpush2.xpose.msra.mxu0 0.0
        %1345 = vmatprep.subr.mxu0 0.0
        %1346 = vmatpush2.xpose.msra.mxu0 0.0
        %1347 = vmatprep.subr.mxu0 0.0
        %1348 = vmatpush2.xpose.msra.mxu0 0.0
        %1349 = vmatprep.subr.mxu0 0.0
        %1350 = vmatpush2.xpose.msra.mxu0 0.0
        %1351 = vmatprep.subr.mxu0 0.0
        %1352 = vmatpush2.xpose.msra.mxu0 0.0
        %1353 = vmatprep.subr.mxu0 0.0
        %1354 = vmatpush2.xpose.msra.mxu0 0.0
        %1355 = vmatprep.subr.mxu0 0.0
        %1356 = vmatpush2.xpose.msra.mxu0 0.0
        %1357 = vmatprep.subr.mxu0 0.0
        %1358 = vmatpush2.xpose.msra.mxu0 0.0
        %1359 = vmatprep.subr.mxu0 0.0
        %1360 = vmatpush2.xpose.msra.mxu0 0.0
        %1361 = vmatprep.subr.mxu0 0.0
        %1362 = vmatpush2.xpose.msra.mxu0 0.0
        %1363 = vmatprep.subr.mxu0 0.0
        %1364 = vmatpush2.xpose.msra.mxu0 0.0
        %1365 = vmatprep.subr.mxu0 0.0
        %1366 = vmatpush2.xpose.msra.mxu0 0.0
        %1367 = vmatprep.mubr.f32.mxu0 0.0
        %1368 = vmatmul.mubr.f32.gmra.mxu0 %v1299
        %v1369 = vpop.f32.mrf.mxu0
        %v1370 = vadd.f32 0.0, %v1369
        %v1371 = vpop.f32.mrf.mxu0
        %1372 = vdwg.mxu0
        %v1373 = vmul.f32 %v1370, 0.35355338
        %v1374 = vsel %vm1133, %v1373, -inf
        %1375 = vmax.xlane.f32.xlu0 %v1374
        %v1376 = vpop.xlane.xlu0 %1375
        %v1377 = vsub.f32 %v1373, %v1376
        %v1378 = vmul.f32 %v1377, 1.442695
        %v1379 = vpow.pop %v1378
        %v1380 = vsel %vm1133, %v1379, 0.0
        %1381 = vadd.xlane.f32.xlu0 %v1380
        %v1382 = vpop.xlane.xlu0 %1381
        %v1383 = vrcp.pop %v1382
        %v1384 = vmul.f32 %v1379, %v1383
        %1386 = vrot.lane.b32.xlu0 %v1130, 120
        %v1387 = vpop.permute.xlu0 %1386
        %v1390 = vsel %vm1133, %v1384, 0
        %1392 = vmatprep.subr.mxu0 0.0
        %1393 = vmatpush1.msra.mxu0 0.0
        %1394 = vmatprep.subr.mxu0 0.0
        %1395 = vmatpush1.msra.mxu0 0.0
        %1396 = vmatprep.subr.mxu0 0.0
        %1397 = vmatpush1.msra.mxu0 0.0
        %1398 = vmatprep.subr.mxu0 0.0
        %1399 = vmatpush1.msra.mxu0 0.0
        %1400 = vmatprep.subr.mxu0 0.0
        %1401 = vmatpush1.msra.mxu0 0.0
        %1402 = vmatprep.subr.mxu0 0.0
        %1403 = vmatpush1.msra.mxu0 0.0
        %1404 = vmatprep.subr.mxu0 0.0
        %1405 = vmatpush1.msra.mxu0 0.0
        %1406 = vmatprep.subr.mxu0 0.0
        %1407 = vmatpush1.msra.mxu0 0.0
        %1408 = vmatprep.subr.mxu0 0.0
        %1409 = vmatpush1.msra.mxu0 0.0
        %1410 = vmatprep.subr.mxu0 0.0
        %1411 = vmatpush1.msra.mxu0 0.0
        %1412 = vmatprep.subr.mxu0 0.0
        %1413 = vmatpush1.msra.mxu0 0.0
        %1414 = vmatprep.subr.mxu0 0.0
        %1415 = vmatpush1.msra.mxu0 0.0
        %1416 = vmatprep.subr.mxu0 0.0
        %1417 = vmatpush1.msra.mxu0 0.0
        %1418 = vmatprep.subr.mxu0 0.0
        %1419 = vmatpush1.msra.mxu0 0.0
        %1420 = vmatprep.subr.mxu0 0.0
        %1421 = vmatpush1.msra.mxu0 0.0
        %1422 = vmatprep.subr.mxu0 0.0
        %1423 = vmatpush1.msra.mxu0 %v1387
        %1424 = vmatprep.subr.mxu0 0.0
        %1425 = vmatpush2.msra.mxu0 0.0
        %1426 = vmatprep.subr.mxu0 0.0
        %1427 = vmatpush2.msra.mxu0 0.0
        %1428 = vmatprep.subr.mxu0 0.0
        %1429 = vmatpush2.msra.mxu0 0.0
        %1430 = vmatprep.subr.mxu0 0.0
        %1431 = vmatpush2.msra.mxu0 0.0
        %1432 = vmatprep.subr.mxu0 0.0
        %1433 = vmatpush2.msra.mxu0 0.0
        %1434 = vmatprep.subr.mxu0 0.0
        %1435 = vmatpush2.msra.mxu0 0.0
        %1436 = vmatprep.subr.mxu0 0.0
        %1437 = vmatpush2.msra.mxu0 0.0
        %1438 = vmatprep.subr.mxu0 0.0
        %1439 = vmatpush2.msra.mxu0 0.0
        %1440 = vmatprep.subr.mxu0 0.0
        %1441 = vmatpush2.msra.mxu0 0.0
        %1442 = vmatprep.subr.mxu0 0.0
        %1443 = vmatpush2.msra.mxu0 0.0
        %1444 = vmatprep.subr.mxu0 0.0
        %1445 = vmatpush2.msra.mxu0 0.0
        %1446 = vmatprep.subr.mxu0 0.0
        %1447 = vmatpush2.msra.mxu0 0.0
        %1448 = vmatprep.subr.mxu0 0.0
        %1449 = vmatpush2.msra.mxu0 0.0
        %1450 = vmatprep.subr.mxu0 0.0
        %1451 = vmatpush2.msra.mxu0 0.0
        %1452 = vmatprep.subr.mxu0 0.0
        %1453 = vmatpush2.msra.mxu0 0.0
        %1454 = vmatprep.subr.mxu0 0.0
        %1455 = vmatpush2.msra.mxu0 0.0
        %1456 = vmatprep.mubr.f32.mxu0 0.0
        %1457 = vmatmul.mubr.f32.gmra.mxu0 %v1390
        %v1458 = vpop.f32.mrf.mxu0
        %v1459 = vadd.f32 0.0, %v1458
        %v1460 = vpop.f32.mrf.mxu0
        %1461 = vdwg.mxu0
        %v1463 = vsel %vm1133, %v1459, 0
        %1465 = vmatprep.subr.mxu0 0.0
        %1466 = vmatpush1.msra.mxu0 0.0
        %1467 = vmatprep.subr.mxu0 0.0
        %1468 = vmatpush1.msra.mxu0 0.0
        %1469 = vmatprep.subr.mxu0 0.0
        %1470 = vmatpush1.msra.mxu0 0.0
        %1471 = vmatprep.subr.mxu0 0.0
        %1472 = vmatpush1.msra.mxu0 0.0
        %1473 = vmatprep.subr.mxu0 0.0
        %1474 = vmatpush1.msra.mxu0 0.0
        %1475 = vmatprep.subr.mxu0 0.0
        %1476 = vmatpush1.msra.mxu0 0.0
        %1477 = vmatprep.subr.mxu0 0.0
        %1478 = vmatpush1.msra.mxu0 0.0
        %1479 = vmatprep.subr.mxu0 0.0
        %1480 = vmatpush1.msra.mxu0 0.0
        %1481 = vmatprep.subr.mxu0 0.0
        %1482 = vmatpush1.msra.mxu0 0.0
        %1483 = vmatprep.subr.mxu0 0.0
        %1484 = vmatpush1.msra.mxu0 0.0
        %1485 = vmatprep.subr.mxu0 0.0
        %1486 = vmatpush1.msra.mxu0 0.0
        %1487 = vmatprep.subr.mxu0 0.0
        %1488 = vmatpush1.msra.mxu0 0.0
        %1489 = vmatprep.subr.mxu0 0.0
        %1490 = vmatpush1.msra.mxu0 0.0
        %1491 = vmatprep.subr.mxu0 0.0
        %1492 = vmatpush1.msra.mxu0 0.0
        %1493 = vmatprep.subr.mxu0 0.0
        %1494 = vmatpush1.msra.mxu0 0.0
        %1495 = vmatprep.subr.mxu0 0.0
        %1496 = vmatpush1.msra.mxu0 %v894
        %1497 = vmatprep.subr.mxu0 0.0
        %1498 = vmatpush2.msra.mxu0 0.0
        %1499 = vmatprep.subr.mxu0 0.0
        %1500 = vmatpush2.msra.mxu0 0.0
        %1501 = vmatprep.subr.mxu0 0.0
        %1502 = vmatpush2.msra.mxu0 0.0
        %1503 = vmatprep.subr.mxu0 0.0
        %1504 = vmatpush2.msra.mxu0 0.0
        %1505 = vmatprep.subr.mxu0 0.0
        %1506 = vmatpush2.msra.mxu0 0.0
        %1507 = vmatprep.subr.mxu0 0.0
        %1508 = vmatpush2.msra.mxu0 0.0
        %1509 = vmatprep.subr.mxu0 0.0
        %1510 = vmatpush2.msra.mxu0 0.0
        %1511 = vmatprep.subr.mxu0 0.0
        %1512 = vmatpush2.msra.mxu0 0.0
        %1513 = vmatprep.subr.mxu0 0.0
        %1514 = vmatpush2.msra.mxu0 0.0
        %1515 = vmatprep.subr.mxu0 0.0
        %1516 = vmatpush2.msra.mxu0 0.0
        %1517 = vmatprep.subr.mxu0 0.0
        %1518 = vmatpush2.msra.mxu0 0.0
        %1519 = vmatprep.subr.mxu0 0.0
        %1520 = vmatpush2.msra.mxu0 0.0
        %1521 = vmatprep.subr.mxu0 0.0
        %1522 = vmatpush2.msra.mxu0 0.0
        %1523 = vmatprep.subr.mxu0 0.0
        %1524 = vmatpush2.msra.mxu0 0.0
        %1525 = vmatprep.subr.mxu0 0.0
        %1526 = vmatpush2.msra.mxu0 0.0
        %1527 = vmatprep.subr.mxu0 0.0
        %1528 = vmatpush2.msra.mxu0 0.0
        %1529 = vmatprep.mubr.f32.mxu0 0.0
        %1530 = vmatmul.mubr.f32.gmra.mxu0 %v1463
        %v1531 = vpop.f32.mrf.mxu0
        %v1532 = vadd.f32 0.0, %v1531
        %v1533 = vpop.f32.mrf.mxu0
        %1534 = vdwg.mxu0
        %v1536 = vsel %vm1133, %v1292, 0
        %1538 = vmatprep.subr.mxu0 0.0
        %1539 = vmatpush1.msra.mxu0 0.0
        %1540 = vmatprep.subr.mxu0 0.0
        %1541 = vmatpush1.msra.mxu0 0.0
        %1542 = vmatprep.subr.mxu0 0.0
        %1543 = vmatpush1.msra.mxu0 0.0
        %1544 = vmatprep.subr.mxu0 0.0
        %1545 = vmatpush1.msra.mxu0 0.0
        %1546 = vmatprep.subr.mxu0 0.0
        %1547 = vmatpush1.msra.mxu0 0.0
        %1548 = vmatprep.subr.mxu0 0.0
        %1549 = vmatpush1.msra.mxu0 0.0
        %1550 = vmatprep.subr.mxu0 0.0
        %1551 = vmatpush1.msra.mxu0 0.0
        %1552 = vmatprep.subr.mxu0 0.0
        %1553 = vmatpush1.msra.mxu0 0.0
        %1554 = vmatprep.subr.mxu0 0.0
        %1555 = vmatpush1.msra.mxu0 0.0
        %1556 = vmatprep.subr.mxu0 0.0
        %1557 = vmatpush1.msra.mxu0 0.0
        %1558 = vmatprep.subr.mxu0 0.0
        %1559 = vmatpush1.msra.mxu0 0.0
        %1560 = vmatprep.subr.mxu0 0.0
        %1561 = vmatpush1.msra.mxu0 0.0
        %1562 = vmatprep.subr.mxu0 0.0
        %1563 = vmatpush1.msra.mxu0 0.0
        %1564 = vmatprep.subr.mxu0 0.0
        %1565 = vmatpush1.msra.mxu0 0.0
        %1566 = vmatprep.subr.mxu0 0.0
        %1567 = vmatpush1.msra.mxu0 0.0
        %1568 = vmatprep.subr.mxu0 0.0
        %1569 = vmatpush1.msra.mxu0 %v893
        %1570 = vmatprep.subr.mxu0 0.0
        %1571 = vmatpush2.msra.mxu0 0.0
        %1572 = vmatprep.subr.mxu0 0.0
        %1573 = vmatpush2.msra.mxu0 0.0
        %1574 = vmatprep.subr.mxu0 0.0
        %1575 = vmatpush2.msra.mxu0 0.0
        %1576 = vmatprep.subr.mxu0 0.0
        %1577 = vmatpush2.msra.mxu0 0.0
        %1578 = vmatprep.subr.mxu0 0.0
        %1579 = vmatpush2.msra.mxu0 0.0
        %1580 = vmatprep.subr.mxu0 0.0
        %1581 = vmatpush2.msra.mxu0 0.0
        %1582 = vmatprep.subr.mxu0 0.0
        %1583 = vmatpush2.msra.mxu0 0.0
        %1584 = vmatprep.subr.mxu0 0.0
        %1585 = vmatpush2.msra.mxu0 0.0
        %1586 = vmatprep.subr.mxu0 0.0
        %1587 = vmatpush2.msra.mxu0 0.0
        %1588 = vmatprep.subr.mxu0 0.0
        %1589 = vmatpush2.msra.mxu0 0.0
        %1590 = vmatprep.subr.mxu0 0.0
        %1591 = vmatpush2.msra.mxu0 0.0
        %1592 = vmatprep.subr.mxu0 0.0
        %1593 = vmatpush2.msra.mxu0 0.0
        %1594 = vmatprep.subr.mxu0 0.0
        %1595 = vmatpush2.msra.mxu0 0.0
        %1596 = vmatprep.subr.mxu0 0.0
        %1597 = vmatpush2.msra.mxu0 0.0
        %1598 = vmatprep.subr.mxu0 0.0
        %1599 = vmatpush2.msra.mxu0 0.0
        %1600 = vmatprep.subr.mxu0 0.0
        %1601 = vmatpush2.msra.mxu0 0.0
        %1602 = vmatprep.mubr.f32.mxu0 0.0
        %1603 = vmatmul.mubr.f32.gmra.mxu0 %v1536
        %v1604 = vpop.f32.mrf.mxu0
        %v1605 = vadd.f32 %v1532, %v1604
        %v1606 = vpop.f32.mrf.mxu0
        %1607 = vdwg.mxu0
        %1608 = vrot.lane.b32.xlu0 %v978, 112
        %v1609 = vpop.permute.xlu0 %1608
        %1610 = vrot.lane.b32.xlu0 %v1054, 112
        %v1611 = vpop.permute.xlu0 %1610
        %v1612 = vsel %vm1133, %v1609, 0
        %v1614 = vsel %vm1133, %v1611, 0
        %1616 = vmatprep.subr.mxu0 0.0
        %1617 = vmatpush1.xpose.msra.mxu0 0.0
        %1618 = vmatprep.subr.mxu0 0.0
        %1619 = vmatpush1.xpose.msra.mxu0 0.0
        %1620 = vmatprep.subr.mxu0 0.0
        %1621 = vmatpush1.xpose.msra.mxu0 0.0
        %1622 = vmatprep.subr.mxu0 0.0
        %1623 = vmatpush1.xpose.msra.mxu0 0.0
        %1624 = vmatprep.subr.mxu0 0.0
        %1625 = vmatpush1.xpose.msra.mxu0 0.0
        %1626 = vmatprep.subr.mxu0 0.0
        %1627 = vmatpush1.xpose.msra.mxu0 0.0
        %1628 = vmatprep.subr.mxu0 0.0
        %1629 = vmatpush1.xpose.msra.mxu0 0.0
        %1630 = vmatprep.subr.mxu0 0.0
        %1631 = vmatpush1.xpose.msra.mxu0 0.0
        %1632 = vmatprep.subr.mxu0 0.0
        %1633 = vmatpush1.xpose.msra.mxu0 0.0
        %1634 = vmatprep.subr.mxu0 0.0
        %1635 = vmatpush1.xpose.msra.mxu0 0.0
        %1636 = vmatprep.subr.mxu0 0.0
        %1637 = vmatpush1.xpose.msra.mxu0 0.0
        %1638 = vmatprep.subr.mxu0 0.0
        %1639 = vmatpush1.xpose.msra.mxu0 0.0
        %1640 = vmatprep.subr.mxu0 0.0
        %1641 = vmatpush1.xpose.msra.mxu0 0.0
        %1642 = vmatprep.subr.mxu0 0.0
        %1643 = vmatpush1.xpose.msra.mxu0 0.0
        %1644 = vmatprep.subr.mxu0 0.0
        %1645 = vmatpush1.xpose.msra.mxu0 0.0
        %1646 = vmatprep.subr.mxu0 0.0
        %1647 = vmatpush1.xpose.msra.mxu0 %v1614
        %1648 = vmatprep.subr.mxu0 0.0
        %1649 = vmatpush2.xpose.msra.mxu0 0.0
        %1650 = vmatprep.subr.mxu0 0.0
        %1651 = vmatpush2.xpose.msra.mxu0 0.0
        %1652 = vmatprep.subr.mxu0 0.0
        %1653 = vmatpush2.xpose.msra.mxu0 0.0
        %1654 = vmatprep.subr.mxu0 0.0
        %1655 = vmatpush2.xpose.msra.mxu0 0.0
        %1656 = vmatprep.subr.mxu0 0.0
        %1657 = vmatpush2.xpose.msra.mxu0 0.0
        %1658 = vmatprep.subr.mxu0 0.0
        %1659 = vmatpush2.xpose.msra.mxu0 0.0
        %1660 = vmatprep.subr.mxu0 0.0
        %1661 = vmatpush2.xpose.msra.mxu0 0.0
        %1662 = vmatprep.subr.mxu0 0.0
        %1663 = vmatpush2.xpose.msra.mxu0 0.0
        %1664 = vmatprep.subr.mxu0 0.0
        %1665 = vmatpush2.xpose.msra.mxu0 0.0
        %1666 = vmatprep.subr.mxu0 0.0
        %1667 = vmatpush2.xpose.msra.mxu0 0.0
        %1668 = vmatprep.subr.mxu0 0.0
        %1669 = vmatpush2.xpose.msra.mxu0 0.0
        %1670 = vmatprep.subr.mxu0 0.0
        %1671 = vmatpush2.xpose.msra.mxu0 0.0
        %1672 = vmatprep.subr.mxu0 0.0
        %1673 = vmatpush2.xpose.msra.mxu0 0.0
        %1674 = vmatprep.subr.mxu0 0.0
        %1675 = vmatpush2.xpose.msra.mxu0 0.0
        %1676 = vmatprep.subr.mxu0 0.0
        %1677 = vmatpush2.xpose.msra.mxu0 0.0
        %1678 = vmatprep.subr.mxu0 0.0
        %1679 = vmatpush2.xpose.msra.mxu0 0.0
        %1680 = vmatprep.mubr.f32.mxu0 0.0
        %1681 = vmatmul.mubr.f32.gmra.mxu0 %v1612
        %v1682 = vpop.f32.mrf.mxu0
        %v1683 = vadd.f32 0.0, %v1682
        %v1684 = vpop.f32.mrf.mxu0
        %1685 = vdwg.mxu0
        %v1686 = vmul.f32 %v1683, 0.35355338
        %v1687 = vsel %vm1133, %v1686, -inf
        %1688 = vmax.xlane.f32.xlu0 %v1687
        %v1689 = vpop.xlane.xlu0 %1688
        %v1690 = vsub.f32 %v1686, %v1689
        %v1691 = vmul.f32 %v1690, 1.442695
        %v1692 = vpow.pop %v1691
        %v1693 = vsel %vm1133, %v1692, 0.0
        %1694 = vadd.xlane.f32.xlu0 %v1693
        %v1695 = vpop.xlane.xlu0 %1694
        %v1696 = vrcp.pop %v1695
        %v1697 = vmul.f32 %v1692, %v1696
        %1698 = vrot.lane.b32.xlu0 %v1130, 112
        %v1699 = vpop.permute.xlu0 %1698
        %v1702 = vsel %vm1133, %v1697, 0
        %1704 = vmatprep.subr.mxu0 0.0
        %1705 = vmatpush1.msra.mxu0 0.0
        %1706 = vmatprep.subr.mxu0 0.0
        %1707 = vmatpush1.msra.mxu0 0.0
        %1708 = vmatprep.subr.mxu0 0.0
        %1709 = vmatpush1.msra.mxu0 0.0
        %1710 = vmatprep.subr.mxu0 0.0
        %1711 = vmatpush1.msra.mxu0 0.0
        %1712 = vmatprep.subr.mxu0 0.0
        %1713 = vmatpush1.msra.mxu0 0.0
        %1714 = vmatprep.subr.mxu0 0.0
        %1715 = vmatpush1.msra.mxu0 0.0
        %1716 = vmatprep.subr.mxu0 0.0
        %1717 = vmatpush1.msra.mxu0 0.0
        %1718 = vmatprep.subr.mxu0 0.0
        %1719 = vmatpush1.msra.mxu0 0.0
        %1720 = vmatprep.subr.mxu0 0.0
        %1721 = vmatpush1.msra.mxu0 0.0
        %1722 = vmatprep.subr.mxu0 0.0
        %1723 = vmatpush1.msra.mxu0 0.0
        %1724 = vmatprep.subr.mxu0 0.0
        %1725 = vmatpush1.msra.mxu0 0.0
        %1726 = vmatprep.subr.mxu0 0.0
        %1727 = vmatpush1.msra.mxu0 0.0
        %1728 = vmatprep.subr.mxu0 0.0
        %1729 = vmatpush1.msra.mxu0 0.0
        %1730 = vmatprep.subr.mxu0 0.0
        %1731 = vmatpush1.msra.mxu0 0.0
        %1732 = vmatprep.subr.mxu0 0.0
        %1733 = vmatpush1.msra.mxu0 0.0
        %1734 = vmatprep.subr.mxu0 0.0
        %1735 = vmatpush1.msra.mxu0 %v1699
        %1736 = vmatprep.subr.mxu0 0.0
        %1737 = vmatpush2.msra.mxu0 0.0
        %1738 = vmatprep.subr.mxu0 0.0
        %1739 = vmatpush2.msra.mxu0 0.0
        %1740 = vmatprep.subr.mxu0 0.0
        %1741 = vmatpush2.msra.mxu0 0.0
        %1742 = vmatprep.subr.mxu0 0.0
        %1743 = vmatpush2.msra.mxu0 0.0
        %1744 = vmatprep.subr.mxu0 0.0
        %1745 = vmatpush2.msra.mxu0 0.0
        %1746 = vmatprep.subr.mxu0 0.0
        %1747 = vmatpush2.msra.mxu0 0.0
        %1748 = vmatprep.subr.mxu0 0.0
        %1749 = vmatpush2.msra.mxu0 0.0
        %1750 = vmatprep.subr.mxu0 0.0
        %1751 = vmatpush2.msra.mxu0 0.0
        %1752 = vmatprep.subr.mxu0 0.0
        %1753 = vmatpush2.msra.mxu0 0.0
        %1754 = vmatprep.subr.mxu0 0.0
        %1755 = vmatpush2.msra.mxu0 0.0
        %1756 = vmatprep.subr.mxu0 0.0
        %1757 = vmatpush2.msra.mxu0 0.0
        %1758 = vmatprep.subr.mxu0 0.0
        %1759 = vmatpush2.msra.mxu0 0.0
        %1760 = vmatprep.subr.mxu0 0.0
        %1761 = vmatpush2.msra.mxu0 0.0
        %1762 = vmatprep.subr.mxu0 0.0
        %1763 = vmatpush2.msra.mxu0 0.0
        %1764 = vmatprep.subr.mxu0 0.0
        %1765 = vmatpush2.msra.mxu0 0.0
        %1766 = vmatprep.subr.mxu0 0.0
        %1767 = vmatpush2.msra.mxu0 0.0
        %1768 = vmatprep.mubr.f32.mxu0 0.0
        %1769 = vmatmul.mubr.f32.gmra.mxu0 %v1702
        %v1770 = vpop.f32.mrf.mxu0
        %v1771 = vadd.f32 0.0, %v1770
        %v1772 = vpop.f32.mrf.mxu0
        %1773 = vdwg.mxu0
        %v1775 = vsel %vm1133, %v1771, 0
        %1777 = vmatprep.subr.mxu0 0.0
        %1778 = vmatpush1.msra.mxu0 0.0
        %1779 = vmatprep.subr.mxu0 0.0
        %1780 = vmatpush1.msra.mxu0 0.0
        %1781 = vmatprep.subr.mxu0 0.0
        %1782 = vmatpush1.msra.mxu0 0.0
        %1783 = vmatprep.subr.mxu0 0.0
        %1784 = vmatpush1.msra.mxu0 0.0
        %1785 = vmatprep.subr.mxu0 0.0
        %1786 = vmatpush1.msra.mxu0 0.0
        %1787 = vmatprep.subr.mxu0 0.0
        %1788 = vmatpush1.msra.mxu0 0.0
        %1789 = vmatprep.subr.mxu0 0.0
        %1790 = vmatpush1.msra.mxu0 0.0
        %1791 = vmatprep.subr.mxu0 0.0
        %1792 = vmatpush1.msra.mxu0 0.0
        %1793 = vmatprep.subr.mxu0 0.0
        %1794 = vmatpush1.msra.mxu0 0.0
        %1795 = vmatprep.subr.mxu0 0.0
        %1796 = vmatpush1.msra.mxu0 0.0
        %1797 = vmatprep.subr.mxu0 0.0
        %1798 = vmatpush1.msra.mxu0 0.0
        %1799 = vmatprep.subr.mxu0 0.0
        %1800 = vmatpush1.msra.mxu0 0.0
        %1801 = vmatprep.subr.mxu0 0.0
        %1802 = vmatpush1.msra.mxu0 0.0
        %1803 = vmatprep.subr.mxu0 0.0
        %1804 = vmatpush1.msra.mxu0 0.0
        %1805 = vmatprep.subr.mxu0 0.0
        %1806 = vmatpush1.msra.mxu0 0.0
        %1807 = vmatprep.subr.mxu0 0.0
        %1808 = vmatpush1.msra.mxu0 %v895
        %1809 = vmatprep.subr.mxu0 0.0
        %1810 = vmatpush2.msra.mxu0 0.0
        %1811 = vmatprep.subr.mxu0 0.0
        %1812 = vmatpush2.msra.mxu0 0.0
        %1813 = vmatprep.subr.mxu0 0.0
        %1814 = vmatpush2.msra.mxu0 0.0
        %1815 = vmatprep.subr.mxu0 0.0
        %1816 = vmatpush2.msra.mxu0 0.0
        %1817 = vmatprep.subr.mxu0 0.0
        %1818 = vmatpush2.msra.mxu0 0.0
        %1819 = vmatprep.subr.mxu0 0.0
        %1820 = vmatpush2.msra.mxu0 0.0
        %1821 = vmatprep.subr.mxu0 0.0
        %1822 = vmatpush2.msra.mxu0 0.0
        %1823 = vmatprep.subr.mxu0 0.0
        %1824 = vmatpush2.msra.mxu0 0.0
        %1825 = vmatprep.subr.mxu0 0.0
        %1826 = vmatpush2.msra.mxu0 0.0
        %1827 = vmatprep.subr.mxu0 0.0
        %1828 = vmatpush2.msra.mxu0 0.0
        %1829 = vmatprep.subr.mxu0 0.0
        %1830 = vmatpush2.msra.mxu0 0.0
        %1831 = vmatprep.subr.mxu0 0.0
        %1832 = vmatpush2.msra.mxu0 0.0
        %1833 = vmatprep.subr.mxu0 0.0
        %1834 = vmatpush2.msra.mxu0 0.0
        %1835 = vmatprep.subr.mxu0 0.0
        %1836 = vmatpush2.msra.mxu0 0.0
        %1837 = vmatprep.subr.mxu0 0.0
        %1838 = vmatpush2.msra.mxu0 0.0
        %1839 = vmatprep.subr.mxu0 0.0
        %1840 = vmatpush2.msra.mxu0 0.0
        %1841 = vmatprep.mubr.f32.mxu0 0.0
        %1842 = vmatmul.mubr.f32.gmra.mxu0 %v1775
        %v1843 = vpop.f32.mrf.mxu0
        %v1844 = vadd.f32 0.0, %v1843
        %v1845 = vpop.f32.mrf.mxu0
        %1846 = vdwg.mxu0
        %v1847 = vadd.f32 %v1605, %v1844
        %1848 = vrot.lane.b32.xlu0 %v978, 104
        %v1849 = vpop.permute.xlu0 %1848
        %1850 = vrot.lane.b32.xlu0 %v1054, 104
        %v1851 = vpop.permute.xlu0 %1850
        %v1852 = vsel %vm1133, %v1849, 0
        %v1854 = vsel %vm1133, %v1851, 0
        %1856 = vmatprep.subr.mxu0 0.0
        %1857 = vmatpush1.xpose.msra.mxu0 0.0
        %1858 = vmatprep.subr.mxu0 0.0
        %1859 = vmatpush1.xpose.msra.mxu0 0.0
        %1860 = vmatprep.subr.mxu0 0.0
        %1861 = vmatpush1.xpose.msra.mxu0 0.0
        %1862 = vmatprep.subr.mxu0 0.0
        %1863 = vmatpush1.xpose.msra.mxu0 0.0
        %1864 = vmatprep.subr.mxu0 0.0
        %1865 = vmatpush1.xpose.msra.mxu0 0.0
        %1866 = vmatprep.subr.mxu0 0.0
        %1867 = vmatpush1.xpose.msra.mxu0 0.0
        %1868 = vmatprep.subr.mxu0 0.0
        %1869 = vmatpush1.xpose.msra.mxu0 0.0
        %1870 = vmatprep.subr.mxu0 0.0
        %1871 = vmatpush1.xpose.msra.mxu0 0.0
        %1872 = vmatprep.subr.mxu0 0.0
        %1873 = vmatpush1.xpose.msra.mxu0 0.0
        %1874 = vmatprep.subr.mxu0 0.0
        %1875 = vmatpush1.xpose.msra.mxu0 0.0
        %1876 = vmatprep.subr.mxu0 0.0
        %1877 = vmatpush1.xpose.msra.mxu0 0.0
        %1878 = vmatprep.subr.mxu0 0.0
        %1879 = vmatpush1.xpose.msra.mxu0 0.0
        %1880 = vmatprep.subr.mxu0 0.0
        %1881 = vmatpush1.xpose.msra.mxu0 0.0
        %1882 = vmatprep.subr.mxu0 0.0
        %1883 = vmatpush1.xpose.msra.mxu0 0.0
        %1884 = vmatprep.subr.mxu0 0.0
        %1885 = vmatpush1.xpose.msra.mxu0 0.0
        %1886 = vmatprep.subr.mxu0 0.0
        %1887 = vmatpush1.xpose.msra.mxu0 %v1854
        %1888 = vmatprep.subr.mxu0 0.0
        %1889 = vmatpush2.xpose.msra.mxu0 0.0
        %1890 = vmatprep.subr.mxu0 0.0
        %1891 = vmatpush2.xpose.msra.mxu0 0.0
        %1892 = vmatprep.subr.mxu0 0.0
        %1893 = vmatpush2.xpose.msra.mxu0 0.0
        %1894 = vmatprep.subr.mxu0 0.0
        %1895 = vmatpush2.xpose.msra.mxu0 0.0
        %1896 = vmatprep.subr.mxu0 0.0
        %1897 = vmatpush2.xpose.msra.mxu0 0.0
        %1898 = vmatprep.subr.mxu0 0.0
        %1899 = vmatpush2.xpose.msra.mxu0 0.0
        %1900 = vmatprep.subr.mxu0 0.0
        %1901 = vmatpush2.xpose.msra.mxu0 0.0
        %1902 = vmatprep.subr.mxu0 0.0
        %1903 = vmatpush2.xpose.msra.mxu0 0.0
        %1904 = vmatprep.subr.mxu0 0.0
        %1905 = vmatpush2.xpose.msra.mxu0 0.0
        %1906 = vmatprep.subr.mxu0 0.0
        %1907 = vmatpush2.xpose.msra.mxu0 0.0
        %1908 = vmatprep.subr.mxu0 0.0
        %1909 = vmatpush2.xpose.msra.mxu0 0.0
        %1910 = vmatprep.subr.mxu0 0.0
        %1911 = vmatpush2.xpose.msra.mxu0 0.0
        %1912 = vmatprep.subr.mxu0 0.0
        %1913 = vmatpush2.xpose.msra.mxu0 0.0
        %1914 = vmatprep.subr.mxu0 0.0
        %1915 = vmatpush2.xpose.msra.mxu0 0.0
        %1916 = vmatprep.subr.mxu0 0.0
        %1917 = vmatpush2.xpose.msra.mxu0 0.0
        %1918 = vmatprep.subr.mxu0 0.0
        %1919 = vmatpush2.xpose.msra.mxu0 0.0
        %1920 = vmatprep.mubr.f32.mxu0 0.0
        %1921 = vmatmul.mubr.f32.gmra.mxu0 %v1852
        %v1922 = vpop.f32.mrf.mxu0
        %v1923 = vadd.f32 0.0, %v1922
        %v1924 = vpop.f32.mrf.mxu0
        %1925 = vdwg.mxu0
        %v1926 = vmul.f32 %v1923, 0.35355338
        %v1927 = vsel %vm1133, %v1926, -inf
        %1928 = vmax.xlane.f32.xlu0 %v1927
        %v1929 = vpop.xlane.xlu0 %1928
        %v1930 = vsub.f32 %v1926, %v1929
        %v1931 = vmul.f32 %v1930, 1.442695
        %v1932 = vpow.pop %v1931
        %v1933 = vsel %vm1133, %v1932, 0.0
        %1934 = vadd.xlane.f32.xlu0 %v1933
        %v1935 = vpop.xlane.xlu0 %1934
        %v1936 = vrcp.pop %v1935
        %v1937 = vmul.f32 %v1932, %v1936
        %1938 = vrot.lane.b32.xlu0 %v1130, 104
        %v1939 = vpop.permute.xlu0 %1938
        %v1942 = vsel %vm1133, %v1937, 0
        %1944 = vmatprep.subr.mxu0 0.0
        %1945 = vmatpush1.msra.mxu0 0.0
        %1946 = vmatprep.subr.mxu0 0.0
        %1947 = vmatpush1.msra.mxu0 0.0
        %1948 = vmatprep.subr.mxu0 0.0
        %1949 = vmatpush1.msra.mxu0 0.0
        %1950 = vmatprep.subr.mxu0 0.0
        %1951 = vmatpush1.msra.mxu0 0.0
        %1952 = vmatprep.subr.mxu0 0.0
        %1953 = vmatpush1.msra.mxu0 0.0
        %1954 = vmatprep.subr.mxu0 0.0
        %1955 = vmatpush1.msra.mxu0 0.0
        %1956 = vmatprep.subr.mxu0 0.0
        %1957 = vmatpush1.msra.mxu0 0.0
        %1958 = vmatprep.subr.mxu0 0.0
        %1959 = vmatpush1.msra.mxu0 0.0
        %1960 = vmatprep.subr.mxu0 0.0
        %1961 = vmatpush1.msra.mxu0 0.0
        %1962 = vmatprep.subr.mxu0 0.0
        %1963 = vmatpush1.msra.mxu0 0.0
        %1964 = vmatprep.subr.mxu0 0.0
        %1965 = vmatpush1.msra.mxu0 0.0
        %1966 = vmatprep.subr.mxu0 0.0
        %1967 = vmatpush1.msra.mxu0 0.0
        %1968 = vmatprep.subr.mxu0 0.0
        %1969 = vmatpush1.msra.mxu0 0.0
        %1970 = vmatprep.subr.mxu0 0.0
        %1971 = vmatpush1.msra.mxu0 0.0
        %1972 = vmatprep.subr.mxu0 0.0
        %1973 = vmatpush1.msra.mxu0 0.0
        %1974 = vmatprep.subr.mxu0 0.0
        %1975 = vmatpush1.msra.mxu0 %v1939
        %1976 = vmatprep.subr.mxu0 0.0
        %1977 = vmatpush2.msra.mxu0 0.0
        %1978 = vmatprep.subr.mxu0 0.0
        %1979 = vmatpush2.msra.mxu0 0.0
        %1980 = vmatprep.subr.mxu0 0.0
        %1981 = vmatpush2.msra.mxu0 0.0
        %1982 = vmatprep.subr.mxu0 0.0
        %1983 = vmatpush2.msra.mxu0 0.0
        %1984 = vmatprep.subr.mxu0 0.0
        %1985 = vmatpush2.msra.mxu0 0.0
        %1986 = vmatprep.subr.mxu0 0.0
        %1987 = vmatpush2.msra.mxu0 0.0
        %1988 = vmatprep.subr.mxu0 0.0
        %1989 = vmatpush2.msra.mxu0 0.0
        %1990 = vmatprep.subr.mxu0 0.0
        %1991 = vmatpush2.msra.mxu0 0.0
        %1992 = vmatprep.subr.mxu0 0.0
        %1993 = vmatpush2.msra.mxu0 0.0
        %1994 = vmatprep.subr.mxu0 0.0
        %1995 = vmatpush2.msra.mxu0 0.0
        %1996 = vmatprep.subr.mxu0 0.0
        %1997 = vmatpush2.msra.mxu0 0.0
        %1998 = vmatprep.subr.mxu0 0.0
        %1999 = vmatpush2.msra.mxu0 0.0
        %2000 = vmatprep.subr.mxu0 0.0
        %2001 = vmatpush2.msra.mxu0 0.0
        %2002 = vmatprep.subr.mxu0 0.0
        %2003 = vmatpush2.msra.mxu0 0.0
        %2004 = vmatprep.subr.mxu0 0.0
        %2005 = vmatpush2.msra.mxu0 0.0
        %2006 = vmatprep.subr.mxu0 0.0
        %2007 = vmatpush2.msra.mxu0 0.0
        %2008 = vmatprep.mubr.f32.mxu0 0.0
        %2009 = vmatmul.mubr.f32.gmra.mxu0 %v1942
        %v2010 = vpop.f32.mrf.mxu0
        %v2011 = vadd.f32 0.0, %v2010
        %v2012 = vpop.f32.mrf.mxu0
        %2013 = vdwg.mxu0
        %v2015 = vsel %vm1133, %v2011, 0
        %2017 = vmatprep.subr.mxu0 0.0
        %2018 = vmatpush1.msra.mxu0 0.0
        %2019 = vmatprep.subr.mxu0 0.0
        %2020 = vmatpush1.msra.mxu0 0.0
        %2021 = vmatprep.subr.mxu0 0.0
        %2022 = vmatpush1.msra.mxu0 0.0
        %2023 = vmatprep.subr.mxu0 0.0
        %2024 = vmatpush1.msra.mxu0 0.0
        %2025 = vmatprep.subr.mxu0 0.0
        %2026 = vmatpush1.msra.mxu0 0.0
        %2027 = vmatprep.subr.mxu0 0.0
        %2028 = vmatpush1.msra.mxu0 0.0
        %2029 = vmatprep.subr.mxu0 0.0
        %2030 = vmatpush1.msra.mxu0 0.0
        %2031 = vmatprep.subr.mxu0 0.0
        %2032 = vmatpush1.msra.mxu0 0.0
        %2033 = vmatprep.subr.mxu0 0.0
        %2034 = vmatpush1.msra.mxu0 0.0
        %2035 = vmatprep.subr.mxu0 0.0
        %2036 = vmatpush1.msra.mxu0 0.0
        %2037 = vmatprep.subr.mxu0 0.0
        %2038 = vmatpush1.msra.mxu0 0.0
        %2039 = vmatprep.subr.mxu0 0.0
        %2040 = vmatpush1.msra.mxu0 0.0
        %2041 = vmatprep.subr.mxu0 0.0
        %2042 = vmatpush1.msra.mxu0 0.0
        %2043 = vmatprep.subr.mxu0 0.0
        %2044 = vmatpush1.msra.mxu0 0.0
        %2045 = vmatprep.subr.mxu0 0.0
        %2046 = vmatpush1.msra.mxu0 0.0
        %2047 = vmatprep.subr.mxu0 0.0
        %2048 = vmatpush1.msra.mxu0 %v896
        %2049 = vmatprep.subr.mxu0 0.0
        %2050 = vmatpush2.msra.mxu0 0.0
        %2051 = vmatprep.subr.mxu0 0.0
        %2052 = vmatpush2.msra.mxu0 0.0
        %2053 = vmatprep.subr.mxu0 0.0
        %2054 = vmatpush2.msra.mxu0 0.0
        %2055 = vmatprep.subr.mxu0 0.0
        %2056 = vmatpush2.msra.mxu0 0.0
        %2057 = vmatprep.subr.mxu0 0.0
        %2058 = vmatpush2.msra.mxu0 0.0
        %2059 = vmatprep.subr.mxu0 0.0
        %2060 = vmatpush2.msra.mxu0 0.0
        %2061 = vmatprep.subr.mxu0 0.0
        %2062 = vmatpush2.msra.mxu0 0.0
        %2063 = vmatprep.subr.mxu0 0.0
        %2064 = vmatpush2.msra.mxu0 0.0
        %2065 = vmatprep.subr.mxu0 0.0
        %2066 = vmatpush2.msra.mxu0 0.0
        %2067 = vmatprep.subr.mxu0 0.0
        %2068 = vmatpush2.msra.mxu0 0.0
        %2069 = vmatprep.subr.mxu0 0.0
        %2070 = vmatpush2.msra.mxu0 0.0
        %2071 = vmatprep.subr.mxu0 0.0
        %2072 = vmatpush2.msra.mxu0 0.0
        %2073 = vmatprep.subr.mxu0 0.0
        %2074 = vmatpush2.msra.mxu0 0.0
        %2075 = vmatprep.subr.mxu0 0.0
        %2076 = vmatpush2.msra.mxu0 0.0
        %2077 = vmatprep.subr.mxu0 0.0
        %2078 = vmatpush2.msra.mxu0 0.0
        %2079 = vmatprep.subr.mxu0 0.0
        %2080 = vmatpush2.msra.mxu0 0.0
        %2081 = vmatprep.mubr.f32.mxu0 0.0
        %2082 = vmatmul.mubr.f32.gmra.mxu0 %v2015
        %v2083 = vpop.f32.mrf.mxu0
        %v2084 = vadd.f32 0.0, %v2083
        %v2085 = vpop.f32.mrf.mxu0
        %2086 = vdwg.mxu0
        %v2087 = vadd.f32 %v1847, %v2084
        %v2089 = vlaneseq
        %v2090 = vshrl.u32 %v2089, 7
        %v2091 = vsub.s32 0, %v2090
        %v2092 = vrot.slane %v900, %v2091
        %v2094 = vadd.f32 %v2087, %v2092
        %v2095 = vadd.f32 %v880, %v2094
        %v2096 = vld [vmem:[%s863] sm:$0x1]
        %v2097 = vld [vmem:[%s866] sm:$0x1]
        %v2098 = vsel %vm907, %v2095, 0.0
        %2099 = vadd.xlane.f32.xlu0 %v2098
        %v2100 = vpop.xlane.xlu0 %2099
        %v2101 = vrcp.pop 32.0
        %v2102 = vmul.f32 %v2100, %v2101
        %v2103 = vsub.f32 %v2095, %v2102
        %v2104 = vmul.f32 %v2103, %v2103
        %v2105 = vsel %vm907, %v2104, 0.0
        %2106 = vadd.xlane.f32.xlu0 %v2105
        %v2107 = vpop.xlane.xlu0 %2106
        %v2108 = vmul.f32 %v2107, %v2101
        %v2109 = vadd.f32 %v2108, 1e-05
        %v2110 = vrsqrt.pop %v2109
        %v2111 = vmul.f32 %v2103, %v2110
        %v2113 = vlaneseq
        %v2114 = vshrl.u32 %v2113, 7
        %v2115 = vsub.s32 0, %v2114
        %v2116 = vrot.slane %v2096, %v2115
        %v2118 = vmul.f32 %v2111, %v2116
        %v2120 = vlaneseq
        %v2121 = vshrl.u32 %v2120, 7
        %v2122 = vsub.s32 0, %v2121
        %v2123 = vrot.slane %v2097, %v2122
        %v2125 = vadd.f32 %v2118, %v2123
        %v2126 = vld [vmem:[%s712] sm:$0xff]
        %v2127 = vld [vmem:[%s712 + $0x8] sm:$0xff]
        %v2128 = vld [vmem:[%s712 + $0x10] sm:$0xff]
        %v2129 = vld [vmem:[%s712 + $0x18] sm:$0xff]
        %v2130 = vld [vmem:[%s852] sm:$0x1]
        %v2132 = vlaneseq
        %v2133 = vshrl.u32 %v2132, 7
        %v2134 = vsub.s32 0, %v2133
        %v2135 = vrot.slane %v2130, %v2134
        %v2138 = vsel %vm907, %v2125, 0
        %2140 = vmatprep.subr.mxu0 0.0
        %2141 = vmatpush1.msra.mxu0 0.0
        %2142 = vmatprep.subr.mxu0 0.0
        %2143 = vmatpush1.msra.mxu0 0.0
        %2144 = vmatprep.subr.mxu0 0.0
        %2145 = vmatpush1.msra.mxu0 0.0
        %2146 = vmatprep.subr.mxu0 0.0
        %2147 = vmatpush1.msra.mxu0 0.0
        %2148 = vmatprep.subr.mxu0 0.0
        %2149 = vmatpush1.msra.mxu0 0.0
        %2150 = vmatprep.subr.mxu0 0.0
        %2151 = vmatpush1.msra.mxu0 0.0
        %2152 = vmatprep.subr.mxu0 0.0
        %2153 = vmatpush1.msra.mxu0 0.0
        %2154 = vmatprep.subr.mxu0 0.0
        %2155 = vmatpush1.msra.mxu0 0.0
        %2156 = vmatprep.subr.mxu0 0.0
        %2157 = vmatpush1.msra.mxu0 0.0
        %2158 = vmatprep.subr.mxu0 0.0
        %2159 = vmatpush1.msra.mxu0 0.0
        %2160 = vmatprep.subr.mxu0 0.0
        %2161 = vmatpush1.msra.mxu0 0.0
        %2162 = vmatprep.subr.mxu0 0.0
        %2163 = vmatpush1.msra.mxu0 0.0
        %2164 = vmatprep.subr.mxu0 0.0
        %2165 = vmatpush1.msra.mxu0 %v2129
        %2166 = vmatprep.subr.mxu0 0.0
        %2167 = vmatpush1.msra.mxu0 %v2128
        %2168 = vmatprep.subr.mxu0 0.0
        %2169 = vmatpush1.msra.mxu0 %v2127
        %2170 = vmatprep.subr.mxu0 0.0
        %2171 = vmatpush1.msra.mxu0 %v2126
        %2172 = vmatprep.subr.mxu0 0.0
        %2173 = vmatpush2.msra.mxu0 0.0
        %2174 = vmatprep.subr.mxu0 0.0
        %2175 = vmatpush2.msra.mxu0 0.0
        %2176 = vmatprep.subr.mxu0 0.0
        %2177 = vmatpush2.msra.mxu0 0.0
        %2178 = vmatprep.subr.mxu0 0.0
        %2179 = vmatpush2.msra.mxu0 0.0
        %2180 = vmatprep.subr.mxu0 0.0
        %2181 = vmatpush2.msra.mxu0 0.0
        %2182 = vmatprep.subr.mxu0 0.0
        %2183 = vmatpush2.msra.mxu0 0.0
        %2184 = vmatprep.subr.mxu0 0.0
        %2185 = vmatpush2.msra.mxu0 0.0
        %2186 = vmatprep.subr.mxu0 0.0
        %2187 = vmatpush2.msra.mxu0 0.0
        %2188 = vmatprep.subr.mxu0 0.0
        %2189 = vmatpush2.msra.mxu0 0.0
        %2190 = vmatprep.subr.mxu0 0.0
        %2191 = vmatpush2.msra.mxu0 0.0
        %2192 = vmatprep.subr.mxu0 0.0
        %2193 = vmatpush2.msra.mxu0 0.0
        %2194 = vmatprep.subr.mxu0 0.0
        %2195 = vmatpush2.msra.mxu0 0.0
        %2196 = vmatprep.subr.mxu0 0.0
        %2197 = vmatpush2.msra.mxu0 0.0
        %2198 = vmatprep.subr.mxu0 0.0
        %2199 = vmatpush2.msra.mxu0 0.0
        %2200 = vmatprep.subr.mxu0 0.0
        %2201 = vmatpush2.msra.mxu0 0.0
        %2202 = vmatprep.subr.mxu0 0.0
        %2203 = vmatpush2.msra.mxu0 0.0
        %2204 = vmatprep.mubr.f32.mxu0 0.0
        %2205 = vmatmul.mubr.f32.gmra.mxu0 %v2138
        %v2206 = vpop.f32.mrf.mxu0
        %v2207 = vadd.f32 %v2135, %v2206
        %v2208 = vpop.f32.mrf.mxu0
        %2209 = vdwg.mxu0
        %v2210 = vmax.f32 %v2207, 0.0
        %v2211 = vld [vmem:[%s857] sm:$0xff]
        %v2212 = vld [vmem:[%s857 + $0x8] sm:$0xff]
        %v2213 = vld [vmem:[%s857 + $0x10] sm:$0xff]
        %v2214 = vld [vmem:[%s857 + $0x18] sm:$0xff]
        %v2215 = vld [vmem:[%s857 + $0x20] sm:$0xff]
        %v2216 = vld [vmem:[%s857 + $0x28] sm:$0xff]
        %v2217 = vld [vmem:[%s857 + $0x30] sm:$0xff]
        %v2218 = vld [vmem:[%s857 + $0x38] sm:$0xff]
        %v2219 = vld [vmem:[%s860] sm:$0x1]
        %v2221 = vlaneseq
        %v2222 = vshrl.u32 %v2221, 7
        %v2223 = vsub.s32 0, %v2222
        %v2224 = vrot.slane %v2219, %v2223
        %vm2226 = vcmask 523264
        %v2228 = vsel %vm2226, %v2210, 0
        %2230 = vmatprep.subr.mxu0 0.0
        %2231 = vmatpush1.msra.mxu0 0.0
        %2232 = vmatprep.subr.mxu0 0.0
        %2233 = vmatpush1.msra.mxu0 0.0
        %2234 = vmatprep.subr.mxu0 0.0
        %2235 = vmatpush1.msra.mxu0 0.0
        %2236 = vmatprep.subr.mxu0 0.0
        %2237 = vmatpush1.msra.mxu0 0.0
        %2238 = vmatprep.subr.mxu0 0.0
        %2239 = vmatpush1.msra.mxu0 0.0
        %2240 = vmatprep.subr.mxu0 0.0
        %2241 = vmatpush1.msra.mxu0 0.0
        %2242 = vmatprep.subr.mxu0 0.0
        %2243 = vmatpush1.msra.mxu0 0.0
        %2244 = vmatprep.subr.mxu0 0.0
        %2245 = vmatpush1.msra.mxu0 0.0
        %2246 = vmatprep.subr.mxu0 0.0
        %2247 = vmatpush1.msra.mxu0 %v2218
        %2248 = vmatprep.subr.mxu0 0.0
        %2249 = vmatpush1.msra.mxu0 %v2217
        %2250 = vmatprep.subr.mxu0 0.0
        %2251 = vmatpush1.msra.mxu0 %v2216
        %2252 = vmatprep.subr.mxu0 0.0
        %2253 = vmatpush1.msra.mxu0 %v2215
        %2254 = vmatprep.subr.mxu0 0.0
        %2255 = vmatpush1.msra.mxu0 %v2214
        %2256 = vmatprep.subr.mxu0 0.0
        %2257 = vmatpush1.msra.mxu0 %v2213
        %2258 = vmatprep.subr.mxu0 0.0
        %2259 = vmatpush1.msra.mxu0 %v2212
        %2260 = vmatprep.subr.mxu0 0.0
        %2261 = vmatpush1.msra.mxu0 %v2211
        %2262 = vmatprep.subr.mxu0 0.0
        %2263 = vmatpush2.msra.mxu0 0.0
        %2264 = vmatprep.subr.mxu0 0.0
        %2265 = vmatpush2.msra.mxu0 0.0
        %2266 = vmatprep.subr.mxu0 0.0
        %2267 = vmatpush2.msra.mxu0 0.0
        %2268 = vmatprep.subr.mxu0 0.0
        %2269 = vmatpush2.msra.mxu0 0.0
        %2270 = vmatprep.subr.mxu0 0.0
        %2271 = vmatpush2.msra.mxu0 0.0
        %2272 = vmatprep.subr.mxu0 0.0
        %2273 = vmatpush2.msra.mxu0 0.0
        %2274 = vmatprep.subr.mxu0 0.0
        %2275 = vmatpush2.msra.mxu0 0.0
        %2276 = vmatprep.subr.mxu0 0.0
        %2277 = vmatpush2.msra.mxu0 0.0
        %2278 = vmatprep.subr.mxu0 0.0
        %2279 = vmatpush2.msra.mxu0 0.0
        %2280 = vmatprep.subr.mxu0 0.0
        %2281 = vmatpush2.msra.mxu0 0.0
        %2282 = vmatprep.subr.mxu0 0.0
        %2283 = vmatpush2.msra.mxu0 0.0
        %2284 = vmatprep.subr.mxu0 0.0
        %2285 = vmatpush2.msra.mxu0 0.0
        %2286 = vmatprep.subr.mxu0 0.0
        %2287 = vmatpush2.msra.mxu0 0.0
        %2288 = vmatprep.subr.mxu0 0.0
        %2289 = vmatpush2.msra.mxu0 0.0
        %2290 = vmatprep.subr.mxu0 0.0
        %2291 = vmatpush2.msra.mxu0 0.0
        %2292 = vmatprep.subr.mxu0 0.0
        %2293 = vmatpush2.msra.mxu0 0.0
        %2294 = vmatprep.mubr.f32.mxu0 0.0
        %2295 = vmatmul.mubr.f32.gmra.mxu0 %v2228
        %v2296 = vpop.f32.mrf.mxu0
        %v2297 = vadd.f32 %v2224, %v2296
        %v2298 = vpop.f32.mrf.mxu0
        %2299 = vdwg.mxu0
        %v2300 = vadd.f32 %v2125, %v2297
        %v2301 = vld [vmem:[%s869] sm:$0x1]
        %v2302 = vld [vmem:[%s872] sm:$0x1]
        %v2303 = vsel %vm907, %v2300, 0.0
        %2304 = vadd.xlane.f32.xlu0 %v2303
        %v2305 = vpop.xlane.xlu0 %2304
        %v2306 = vmul.f32 %v2305, %v2101
        %v2307 = vsub.f32 %v2300, %v2306
        %v2308 = vmul.f32 %v2307, %v2307
        %v2309 = vsel %vm907, %v2308, 0.0
        %2310 = vadd.xlane.f32.xlu0 %v2309
        %v2311 = vpop.xlane.xlu0 %2310
        %v2312 = vmul.f32 %v2311, %v2101
        %v2313 = vadd.f32 %v2312, 1e-05
        %v2314 = vrsqrt.pop %v2313
        %v2315 = vmul.f32 %v2307, %v2314
        %v2317 = vlaneseq
        %v2318 = vshrl.u32 %v2317, 7
        %v2319 = vsub.s32 0, %v2318
        %v2320 = vrot.slane %v2301, %v2319
        %v2322 = vmul.f32 %v2315, %v2320
        %v2324 = vlaneseq
        %v2325 = vshrl.u32 %v2324, 7
        %v2326 = vsub.s32 0, %v2325
        %v2327 = vrot.slane %v2302, %v2326
        %v2329 = vadd.f32 %v2322, %v2327
        %2330 = vst.msk [vmem:[#allocation2] sm:$0xff] %vm907, %v2329
        %p2331 = scmp.eq.s32.totalorder %s42, 1
        // Predicated region
        $region105: #{tpu_custom_call.1} parent=87 // pred_check
          %p2332 = pneg %p2331
        $region106: #{tpu_custom_call.1} parent=87 // pred_check_branch
          %2334 = sbr.rel (%p2332) target = $region108
        $region107: #{tpu_custom_call.1} parent=87 // pred_region
          %2335 = vst.msk [vmem:[%s822] sm:$0xff] %vm907, %v2329
        $region108: #{tpu_custom_call.1} parent=87 // pred_fallthru
          _
        %s2336 = sand.u32 %s499, 1
        %s2337 = scalar_lea.sflag [#allocation5], %s2336
        %s2338 = sand.u32 %s499, 1
        %s2339 = smul.addr %s2338, 8
        %s2340 = scalar_lea.vmem [#allocation9], %s2339
        // Predicated region
        $region109: #{tpu_custom_call.1} parent=87 // pred_check
          %p2341 = pneg %p509
        $region110: #{tpu_custom_call.1} parent=87 // pred_check_branch
          %2343 = sbr.rel (%p2341) target = $region112
        $region111: #{tpu_custom_call.1} parent=87 // pred_region
          %s2345 = ssub.s32 128, 128
          %2346 = vsyncadd %s2337, %s2345
          %s2347 = smul.addr %s41, 128
          %s2348 = scalar_lea.hbm %s17, %s2347
          %s2350 = sshll.u32 %s2340, 4
          %s2351 = int_to_ptr.vmem [resolvable:$true] %s2350
          %2353 = dma.vmem_to_hbm [thread:$0]  %s2351, 128, %s2348, %s2337
        $region112: #{tpu_custom_call.1} parent=87 // pred_fallthru
          _
      $region88: #{tpu_custom_call.1} parent=5 // pred_fallthru
        _
      %p2354 = scmp.le.s32.totalorder 2, %s32
      // Predicated region
      $region113: #{tpu_custom_call.1} parent=5 // pred_check
        %p2355 = pneg %p2354
      $region114: #{tpu_custom_call.1} parent=5 // pred_check_branch
        %2357 = sbr.rel (%p2355) target = $region116
      $region115: #{tpu_custom_call.1} parent=5 // pred_region
        %s2358 = ssub.s32 %s32, 2
        // Predicated region
        $region117: #{tpu_custom_call.1} parent=115 // pred_check
          %p2359 = pneg %p515
        $region118: #{tpu_custom_call.1} parent=115 // pred_check_branch
          %2361 = sbr.rel (%p2359) target = $region120
        $region119: #{tpu_custom_call.1} parent=115 // pred_region
          %s2362 = sand.u32 %s500, 1
          %s2363 = scalar_lea.sflag [#allocation5], %s2362
          %s2364 = sand.u32 %s500, 1
          %s2365 = smul.addr %s2364, 8
          %s2366 = scalar_lea.vmem [#allocation9], %s2365
          %2367 = dma.done %s2363, 128
        $region120: #{tpu_custom_call.1} parent=115 // pred_fallthru
          _
      $region116: #{tpu_custom_call.1} parent=5 // pred_fallthru
        _
    $region6: #{tpu_custom_call.1} parent=1 // loop_footer
      %s36 = sadd.s32 1, %s32
    $region7: #{tpu_custom_call.1} parent=1 // loop_footer_branch
      %31 = sbr.rel target = $region3
    $region8: #{tpu_custom_call.1} parent=1 // loop_exit
      _
    %2368 = vsyncpa [#allocation4], 1
    %s2369 = scalar_lea.sflag [#allocation4], 1
    %2370 = vsyncpa %s2369, 1
    %2371 = vsyncpa [#allocation7], 1
    %s2372 = scalar_lea.sflag [#allocation7], 1
    %2373 = vsyncpa %s2372, 1
    %2374 = vsyncpa [#allocation5], 1
    %s2375 = scalar_lea.sflag [#allocation5], 1
    %2376 = vsyncpa %s2375, 1

</llo_original>
